<compile_context>
chip_gen: v7x
topology: tpu7x:2x2x1
jax: 0.10.0
libtpu: 0.0.40
codegen_flags: <defaults>
</compile_context>

<pallas_src>
import functools

import numpy as np

import jax
import jax.numpy as jnp
from jax.experimental import pallas as pl
from jax.experimental.pallas import tpu as pltpu

NEG_SLOPE = 0.2  # LeakyReLU slope used by the SRVP decoder blocks


def _round_up(x, m):
    return (x + m - 1) // m * m


# ----------------------------------------------------------------------------
# Fused decoder kernel: three lane-dense matmuls + bias + activation for one
# batch tile, entirely VMEM-resident.
# ----------------------------------------------------------------------------
def _fused_decoder_kernel(z_ref, m1_ref, c1_ref, m2_ref, c2_ref, m3_ref, c3_ref,
                          o_ref, *, apply_sigmoid):
    mm = functools.partial(jnp.dot, preferred_element_type=jnp.float32)

    # Layer 1 (first_upconv on 1x1 input == dense matmul), LeakyReLU(0.2).
    h = mm(z_ref[...].astype(m1_ref.dtype), m1_ref[...]) + c1_ref[...]
    h = jnp.where(h > 0, h, NEG_SLOPE * h)

    # Layer 2 (ConvT s=2 p=1 as dense NHWC->NHWC matrix), LeakyReLU(0.2).
    h = mm(h.astype(m2_ref.dtype), m2_ref[...]) + c2_ref[...]
    h = jnp.where(h > 0, h, NEG_SLOPE * h)

    # Layer 3 (ConvT s=2 p=1, columns pre-permuted to NCHW-flat order),
    # optional sigmoid.
    h = mm(h.astype(m3_ref.dtype), m3_ref[...]) + c3_ref[...]
    if apply_sigmoid:
        # exp on the EUP, approximate reciprocal also on the EUP -> the whole
        # sigmoid stays off the VALU slots.
        h = pl.reciprocal(1.0 + jnp.exp(-h), approx=True)

    o_ref[...] = h.astype(o_ref.dtype)


# ----------------------------------------------------------------------------
# One-time weight preprocessing (plain JAX glue on weights only).
# ----------------------------------------------------------------------------
def _convt_as_matrix(w, h_in, w_in, stride, pad):
    """PyTorch ConvTranspose2d as a dense matrix on NHWC-flattened vectors.

    w: (Cin, Cout, k, k).  Returns (M, (h_out, w_out)) with
      row index    (i*w_in  + j)*Cin  + ci
      column index (y*w_out + x)*Cout + co
    such that out_flat = in_flat @ M reproduces F.conv_transpose2d(stride, pad).
    """
    cin, cout, k, _ = w.shape
    h_out = (h_in - 1) * stride - 2 * pad + k
    w_out = (w_in - 1) * stride - 2 * pad + k
    hp, wp = h_out + 2 * pad, w_out + 2 * pad
    y_pos = stride * jnp.arange(h_in)[:, None] + jnp.arange(k)[None, :]   # (h_in, k)
    x_pos = stride * jnp.arange(w_in)[:, None] + jnp.arange(k)[None, :]   # (w_in, k)
    sy = jax.nn.one_hot(y_pos, hp, dtype=w.dtype)                         # (h_in, k, hp)
    sx = jax.nn.one_hot(x_pos, wp, dtype=w.dtype)                         # (w_in, k, wp)
    # t[i, j, ci, y, x, co] = sum_{ky,kx} [y == s*i+ky][x == s*j+kx] w[ci, co, ky, kx]
    t = jnp.einsum("iay,jbx,cdab->ijcyxd", sy, sx, w)
    t = t[:, :, :, pad:pad + h_out, pad:pad + w_out, :]
    return t.reshape(h_in * w_in * cin, h_out * w_out * cout), (h_out, w_out)


def _nhwc_cols_to_nchw(m, hw, cout):
    """Permute trailing-axis columns from (y*w + x)*cout + co to (co*h + y)*w + x."""
    h, w = hw
    lead = m.shape[0]
    return (m.reshape(lead, h, w, cout)
             .transpose(0, 3, 1, 2)
             .reshape(lead, cout * h * w))


def pack_decoder_params(params, mat_dtype=jnp.bfloat16):
    """Lower each ConvTranspose2d to a lane-dense matrix + flat bias.

    Call once (weights are static at inference); reuse across forward passes.
    Matrices are stored in bf16 for the MXU; biases stay f32 for the epilogue.
    The last layer's columns are permuted to NCHW-flat order so the kernel
    output is directly a flattened (nc, H, W) frame — no post-kernel transpose.
    """
    w1, b1 = params["w1"], params["b1"]
    w2, b2 = params["w2"], params["b2"]
    w3, b3 = params["w3"], params["b3"]

    m1, hw1 = _convt_as_matrix(w1, 1, 1, stride=1, pad=0)
    m2, hw2 = _convt_as_matrix(w2, hw1[0], hw1[1], stride=2, pad=1)
    m3, hw3 = _convt_as_matrix(w3, hw2[0], hw2[1], stride=2, pad=1)

    nc = int(w3.shape[1])

    def flat_bias(b, hw):
        return jnp.tile(b.astype(jnp.float32), hw[0] * hw[1]).reshape(1, -1)

    c1 = flat_bias(b1, hw1)
    c2 = flat_bias(b2, hw2)
    # Pack-time column permutation of layer 3 -> NCHW-flat output.
    m3 = _nhwc_cols_to_nchw(m3, hw3, nc)
    c3 = _nhwc_cols_to_nchw(flat_bias(b3, hw3), hw3, nc)

    return {
        "m1": m1.astype(mat_dtype), "c1": c1,
        "m2": m2.astype(mat_dtype), "c2": c2,
        "m3": m3.astype(mat_dtype), "c3": c3,
        "out_hw": hw3, "nc": nc, "ny": int(w1.shape[0]),
    }


# ----------------------------------------------------------------------------
# BaseDecoder.forward
# ----------------------------------------------------------------------------
def base_decoder_forward(z, packed, skip=None, sigmoid=True, out_dtype=jnp.bfloat16):
    """z: (B, ny) -> frame (B, nc, H, W) in NCHW, like the PyTorch module."""
    # Decoder instantiated with skip=False; skip tensors are not supported.
    # TODO(synk): to support skip connections, pack conv matrices sized for the
    # channel-concatenated inputs and concat per-layer inside the kernel.
    assert skip is None

    B, ny = z.shape
    m1, c1 = packed["m1"], packed["c1"]
    m2, c2 = packed["m2"], packed["c2"]
    m3, c3 = packed["m3"], packed["c3"]
    n_out = m3.shape[1]
    h_out, w_out = packed["out_hw"]
    nc = packed["nc"]

    # Batch tile: multiple of 8 sublanes, up to 512 rows to amortize the
    # ~0.35us per-grid-step overhead; when the padded batch is >= 16, force at
    # least 2 grid steps so v7x's two TensorCores both get work.
    b8 = _round_up(B, 8)
    tb = min(512, b8)
    if b8 >= 16:
        tb = min(tb, _round_up((b8 + 1) // 2, 8))
    b_pad = _round_up(B, tb)

    z_p = z.astype(jnp.float32)
    if b_pad != B:
        z_p = jnp.pad(z_p, ((0, b_pad - B), (0, 0)))

    flops = 2 * b_pad * (m1.shape[0] * m1.shape[1]
                         + m2.shape[0] * m2.shape[1]
                         + m3.shape[0] * m3.shape[1])
    out_itemsize = jnp.dtype(out_dtype).itemsize
    bytes_accessed = int(z_p.size * 4 + b_pad * n_out * out_itemsize
                         + sum(int(m.size) * m.dtype.itemsize for m in (m1, m2, m3))
                         + (c1.size + c2.size + c3.size) * 4)
    # sigmoid = exp + reciprocal: 2 transcendentals per output element.
    transcendentals = 2 * b_pad * n_out if sigmoid else 0

    kernel = functools.partial(_fused_decoder_kernel, apply_sigmoid=sigmoid)
    out_flat = pl.pallas_call(
        kernel,
        out_shape=jax.ShapeDtypeStruct((b_pad, n_out), out_dtype),
        grid=(b_pad // tb,),
        in_specs=[
            pl.BlockSpec((tb, ny), lambda b: (b, 0)),      # batch-tiled input
            pl.BlockSpec(m1.shape, lambda b: (0, 0)),      # weights: constant
            pl.BlockSpec(c1.shape, lambda b: (0, 0)),      #   index -> stay
            pl.BlockSpec(m2.shape, lambda b: (0, 0)),      #   VMEM-resident
            pl.BlockSpec(c2.shape, lambda b: (0, 0)),      #   across grid steps
            pl.BlockSpec(m3.shape, lambda b: (0, 0)),
            pl.BlockSpec(c3.shape, lambda b: (0, 0)),
        ],
        out_specs=pl.BlockSpec((tb, n_out), lambda b: (b, 0)),
        compiler_params=pltpu.CompilerParams(
            dimension_semantics=("parallel",)),
        cost_estimate=pl.CostEstimate(
            flops=flops,
            transcendentals=transcendentals,
            bytes_accessed=bytes_accessed),
    )(z_p, m1, c1, m2, c2, m3, c3)

    # Columns are already in NCHW-flat order: plain reshape, no transpose.
    return out_flat[:B].reshape(B, nc, h_out, w_out)


# ----------------------------------------------------------------------------
# Pure NumPy reference (definitional PyTorch ConvTranspose2d semantics).
# ----------------------------------------------------------------------------
def _np_conv_transpose2d(x, w, b, stride, pad):
    B, Cin, H, W = x.shape
    _, Cout, k, _ = w.shape
    Hout = (H - 1) * stride - 2 * pad + k
    Wout = (W - 1) * stride - 2 * pad + k
    out = np.zeros((B, Cout, Hout, Wout), dtype=np.float64)
    for bi in range(B):
        for c in range(Cin):
            for i in range(H):
                for j in range(W):
                    for ky in range(k):
                        for kx in range(k):
                            y = stride * i - pad + ky
                            xx = stride * j - pad + kx
                            if 0 <= y < Hout and 0 <= xx < Wout:
                                out[bi, :, y, xx] += x[bi, c, i, j] * w[c, :, ky, kx]
    return out + b.reshape(1, Cout, 1, 1)


def _np_forward(z, p):
    def lrelu(x):
        return np.where(x > 0, x, NEG_SLOPE * x)
    h = z.reshape(z.shape[0], z.shape[1], 1, 1).astype(np.float64)
    h = lrelu(_np_conv_transpose2d(h, p["w1"], p["b1"], 1, 0))
    h = lrelu(_np_conv_transpose2d(h, p["w2"], p["b2"], 2, 1))
    h = _np_conv_transpose2d(h, p["w3"], p["b3"], 2, 1)
    return 1.0 / (1.0 + np.exp(-h))


if __name__ == "__main__":
    key = jax.random.PRNGKey(0)
    B, NY, NF, NC = 2, 32, 8, 3
    k1, k2, k3, k4, kz = jax.random.split(key, 5)

    params = {
        "w1": 0.1 * jax.random.normal(k1, (NY, 2 * NF, 4, 4), jnp.float32),
        "b1": 0.1 * jax.random.normal(k2, (2 * NF,), jnp.float32),
        "w2": 0.1 * jax.random.normal(k3, (2 * NF, NF, 4, 4), jnp.float32),
        "b2": jnp.zeros((NF,), jnp.float32),
        "w3": 0.1 * jax.random.normal(k4, (NF, NC, 4, 4), jnp.float32),
        "b3": jnp.zeros((NC,), jnp.float32),
    }
    z = jax.random.normal(kz, (B, NY), jnp.float32)

    packed = pack_decoder_params(params)               # one-time preprocessing
    out = base_decoder_forward(z, packed, skip=None, sigmoid=True)
    out = jax.block_until_ready(out)
    assert out.shape == (B, NC, 16, 16), out.shape

    ref = _np_forward(np.asarray(z), {k: np.asarray(v) for k, v in params.items()})
    # Tolerance budget: bf16 MXU operands + bf16 output store, f32 accumulate
    # and f32 epilogue; sigmoid output in [0,1].
    np.testing.assert_allclose(np.asarray(out, dtype=np.float32), ref,
                               rtol=2e-2, atol=2e-2)

    print("KERNEL_OK")
</pallas_src>

<mosaic_0001>
module attributes {stable_mosaic.version = 11 : i64} {
  func.func @_fused_decoder_kernel(%arg0: i32, %arg1: memref<8x32xf32, #tpu.memory_space<vmem>>, %arg2: memref<32x256xbf16, #tpu.memory_space<vmem>>, %arg3: memref<1x256xf32, #tpu.memory_space<vmem>>, %arg4: memref<256x512xbf16, #tpu.memory_space<vmem>>, %arg5: memref<1x512xf32, #tpu.memory_space<vmem>>, %arg6: memref<512x768xbf16, #tpu.memory_space<vmem>>, %arg7: memref<1x768xf32, #tpu.memory_space<vmem>>, %arg8: memref<8x768xbf16, #tpu.memory_space<vmem>>) attributes {dimension_semantics = [#tpu.dimension_semantics<parallel>], iteration_bounds = array<i64: 1>, scalar_prefetch = 0 : i64, scratch_operands = 0 : i64, tpu.core_type = #tpu.core_type<tc>, window_params = [{transform_indices = @transform_0, window_bounds = array<i64: 8, 32>}, {pipeline_mode = #tpu.pipeline_mode<synchronous>, transform_indices = @transform_1, window_bounds = array<i64: 32, 256>}, {pipeline_mode = #tpu.pipeline_mode<synchronous>, transform_indices = @transform_2, window_bounds = array<i64: 1, 256>}, {pipeline_mode = #tpu.pipeline_mode<synchronous>, transform_indices = @transform_3, window_bounds = array<i64: 256, 512>}, {pipeline_mode = #tpu.pipeline_mode<synchronous>, transform_indices = @transform_4, window_bounds = array<i64: 1, 512>}, {pipeline_mode = #tpu.pipeline_mode<synchronous>, transform_indices = @transform_5, window_bounds = array<i64: 512, 768>}, {pipeline_mode = #tpu.pipeline_mode<synchronous>, transform_indices = @transform_6, window_bounds = array<i64: 1, 768>}, {transform_indices = @transform_7, window_bounds = array<i64: 8, 768>}]} {
    %c0 = arith.constant 0 : index
    %c0_0 = arith.constant 0 : index
    %0 = vector.load %arg1[%c0, %c0_0] : memref<8x32xf32, #tpu.memory_space<vmem>>, vector<8x32xf32>
    %1 = arith.truncf %0 : vector<8x32xf32> to vector<8x32xbf16>
    %c0_1 = arith.constant 0 : index
    %c0_2 = arith.constant 0 : index
    %2 = vector.load %arg2[%c0_1, %c0_2] : memref<32x256xbf16, #tpu.memory_space<vmem>>, vector<32x256xbf16>
    %cst = arith.constant dense<0.000000e+00> : vector<8x256xf32>
    %3 = tpu.matmul %1, %2, %cst {dimension_numbers = #tpu.dot_dimension_numbers<[1], [0], [0], [1], [0, 0, 1, 1], [], []>} : vector<8x32xbf16>, vector<32x256xbf16>, vector<8x256xf32> -> vector<8x256xf32>
    %c0_3 = arith.constant 0 : index
    %c0_4 = arith.constant 0 : index
    %4 = vector.load %arg3[%c0_3, %c0_4] : memref<1x256xf32, #tpu.memory_space<vmem>>, vector<1x256xf32>
    %5 = vector.broadcast %4 : vector<1x256xf32> to vector<8x256xf32>
    %6 = arith.addf %3, %5 : vector<8x256xf32>
    %cst_5 = arith.constant 0.000000e+00 : f32
    %7 = vector.broadcast %cst_5 : f32 to vector<8x256xf32>
    %8 = arith.cmpf ogt, %6, %7 : vector<8x256xf32>
    %cst_6 = arith.constant 2.000000e-01 : f32
    %9 = vector.broadcast %cst_6 : f32 to vector<8x256xf32>
    %10 = arith.mulf %9, %6 : vector<8x256xf32>
    %11 = arith.select %8, %6, %10 : vector<8x256xi1>, vector<8x256xf32>
    %12 = arith.truncf %11 : vector<8x256xf32> to vector<8x256xbf16>
    %c0_7 = arith.constant 0 : index
    %c0_8 = arith.constant 0 : index
    %13 = vector.load %arg4[%c0_7, %c0_8] : memref<256x512xbf16, #tpu.memory_space<vmem>>, vector<256x512xbf16>
    %cst_9 = arith.constant dense<0.000000e+00> : vector<8x512xf32>
    %14 = tpu.matmul %12, %13, %cst_9 {dimension_numbers = #tpu.dot_dimension_numbers<[1], [0], [0], [1], [0, 0, 1, 1], [], []>} : vector<8x256xbf16>, vector<256x512xbf16>, vector<8x512xf32> -> vector<8x512xf32>
    %c0_10 = arith.constant 0 : index
    %c0_11 = arith.constant 0 : index
    %15 = vector.load %arg5[%c0_10, %c0_11] : memref<1x512xf32, #tpu.memory_space<vmem>>, vector<1x512xf32>
    %16 = vector.broadcast %15 : vector<1x512xf32> to vector<8x512xf32>
    %17 = arith.addf %14, %16 : vector<8x512xf32>
    %cst_12 = arith.constant 0.000000e+00 : f32
    %18 = vector.broadcast %cst_12 : f32 to vector<8x512xf32>
    %19 = arith.cmpf ogt, %17, %18 : vector<8x512xf32>
    %cst_13 = arith.constant 2.000000e-01 : f32
    %20 = vector.broadcast %cst_13 : f32 to vector<8x512xf32>
    %21 = arith.mulf %20, %17 : vector<8x512xf32>
    %22 = arith.select %19, %17, %21 : vector<8x512xi1>, vector<8x512xf32>
    %23 = arith.truncf %22 : vector<8x512xf32> to vector<8x512xbf16>
    %c0_14 = arith.constant 0 : index
    %c0_15 = arith.constant 0 : index
    %24 = vector.load %arg6[%c0_14, %c0_15] : memref<512x768xbf16, #tpu.memory_space<vmem>>, vector<512x768xbf16>
    %cst_16 = arith.constant dense<0.000000e+00> : vector<8x768xf32>
    %25 = tpu.matmul %23, %24, %cst_16 {dimension_numbers = #tpu.dot_dimension_numbers<[1], [0], [0], [1], [0, 0, 1, 1], [], []>} : vector<8x512xbf16>, vector<512x768xbf16>, vector<8x768xf32> -> vector<8x768xf32>
    %c0_17 = arith.constant 0 : index
    %c0_18 = arith.constant 0 : index
    %26 = vector.load %arg7[%c0_17, %c0_18] : memref<1x768xf32, #tpu.memory_space<vmem>>, vector<1x768xf32>
    %27 = vector.broadcast %26 : vector<1x768xf32> to vector<8x768xf32>
    %28 = arith.addf %25, %27 : vector<8x768xf32>
    %cst_19 = arith.constant 0.000000e+00 : f32
    %29 = vector.broadcast %cst_19 : f32 to vector<8x768xf32>
    %30 = arith.subf %29, %28 : vector<8x768xf32>
    %31 = math.exp %30 : vector<8x768xf32>
    %cst_20 = arith.constant 1.000000e+00 : f32
    %32 = vector.broadcast %cst_20 : f32 to vector<8x768xf32>
    %33 = arith.addf %32, %31 : vector<8x768xf32>
    %34 = tpu.reciprocal %33 {approx = true} : vector<8x768xf32> -> vector<8x768xf32>
    %35 = arith.truncf %34 : vector<8x768xf32> to vector<8x768xbf16>
    %c0_21 = arith.constant 0 : index
    %c0_22 = arith.constant 0 : index
    %36 = vector.load %arg8[%c0_21, %c0_22] : memref<8x768xbf16, #tpu.memory_space<vmem>>, vector<8x768xbf16>
    tpu.vector_store %arg8[%c0_21, %c0_22], %35 {strides = array<i32>} : memref<8x768xbf16, #tpu.memory_space<vmem>>, vector<8x768xbf16>,
    return
  }
  func.func @transform_0(%arg0: i32) -> (i32, i32) {
    %c0_i32 = arith.constant 0 : i32
    %c0_i32_0 = arith.constant 0 : i32
    return %arg0, %c0_i32 : i32, i32
  }
  func.func @transform_1(%arg0: i32) -> (i32, i32) {
    %c0_i32 = arith.constant 0 : i32
    %c0_i32_0 = arith.constant 0 : i32
    %c0_i32_1 = arith.constant 0 : i32
    return %c0_i32, %c0_i32_0 : i32, i32
  }
  func.func @transform_2(%arg0: i32) -> (i32, i32) {
    %c0_i32 = arith.constant 0 : i32
    %c0_i32_0 = arith.constant 0 : i32
    %c0_i32_1 = arith.constant 0 : i32
    return %c0_i32, %c0_i32_0 : i32, i32
  }
  func.func @transform_3(%arg0: i32) -> (i32, i32) {
    %c0_i32 = arith.constant 0 : i32
    %c0_i32_0 = arith.constant 0 : i32
    %c0_i32_1 = arith.constant 0 : i32
    return %c0_i32, %c0_i32_0 : i32, i32
  }
  func.func @transform_4(%arg0: i32) -> (i32, i32) {
    %c0_i32 = arith.constant 0 : i32
    %c0_i32_0 = arith.constant 0 : i32
    %c0_i32_1 = arith.constant 0 : i32
    return %c0_i32, %c0_i32_0 : i32, i32
  }
  func.func @transform_5(%arg0: i32) -> (i32, i32) {
    %c0_i32 = arith.constant 0 : i32
    %c0_i32_0 = arith.constant 0 : i32
    %c0_i32_1 = arith.constant 0 : i32
    return %c0_i32, %c0_i32_0 : i32, i32
  }
  func.func @transform_6(%arg0: i32) -> (i32, i32) {
    %c0_i32 = arith.constant 0 : i32
    %c0_i32_0 = arith.constant 0 : i32
    %c0_i32_1 = arith.constant 0 : i32
    return %c0_i32, %c0_i32_0 : i32, i32
  }
  func.func @transform_7(%arg0: i32) -> (i32, i32) {
    %c0_i32 = arith.constant 0 : i32
    %c0_i32_0 = arith.constant 0 : i32
    return %arg0, %c0_i32 : i32, i32
  }
}

</mosaic_0001>

<llo_original>
// kernel: tpu_custom_call.1
$region0: #{tpu_custom_call.1}
  #allocation0 [shape = 'u32[]', space=smem, size = 0x4, offset = 0x4, fixed_abs, tag = 'smem constant byte address 0x4 - core index']
  #allocation1 [shape = 'u32[144,128]{1,0:T(1,128)}', space=vmem, size = 0x12000, scoped, tag = 'internal scratch']
  %s0 = inlined_call_operand.hbm [shape: f32[8,32], index: 0, kind: input, shape index: {}]
  %s1 = inlined_call_operand.hbm [shape: bf16[32,256], index: 1, kind: input, shape index: {}]
  %s2 = inlined_call_operand.hbm [shape: f32[1,256], index: 2, kind: input, shape index: {}]
  %s3 = inlined_call_operand.hbm [shape: bf16[256,512], index: 3, kind: input, shape index: {}]
  %s4 = inlined_call_operand.vmem [shape: f32[1,512], index: 4, kind: input, shape index: {}]
  %s5 = inlined_call_operand.hbm [shape: bf16[512,768], index: 5, kind: input, shape index: {}]
  %s6 = inlined_call_operand.vmem [shape: f32[1,768], index: 6, kind: input, shape index: {}]
  %s7 = inlined_call_operand.hbm [shape: bf16[8,768], index: 7, kind: output, shape index: {}]
  %s8 = sld [smem:[#allocation0]]
  $region58: #{tpu_custom_call.1} parent=0
    _
  %s10 = ssub.s32 1, %s8
  %s11 = scalar_select 0, %s10, %s8
  $region1: #{tpu_custom_call.1} parent=0
    #allocation2 [shape = 'u8[4096]{0}', space=vmem, size = 0x1000, scoped, tag = 'input window, operand 0, single buffered']
    #allocation3 [shape = 's32[1]{0}', space=sflag, size = 0x4, scoped, tag = 'scoped memory for tpu_custom_call.1']
    #allocation4 [shape = 's32[1]{0}', space=sflag, size = 0x4, scoped, tag = 'scoped memory for tpu_custom_call.1']
    #allocation5 [shape = 'u8[16384]{0}', space=vmem, size = 0x4000, scoped, tag = 'input window, operand 1, single buffered']
    #allocation6 [shape = 's32[1]{0}', space=sflag, size = 0x4, scoped, tag = 'scoped memory for tpu_custom_call.1']
    #allocation7 [shape = 'u8[1024]{0}', space=vmem, size = 0x400, scoped, tag = 'input window, operand 2, single buffered']
    #allocation8 [shape = 'u8[262144]{0}', space=vmem, size = 0x40000, scoped, tag = 'input window, operand 3, single buffered']
    #allocation9 [shape = 's32[1]{0}', space=sflag, size = 0x4, scoped, tag = 'scoped memory for tpu_custom_call.1']
    #allocation10 [shape = 'u8[786432]{0}', space=vmem, size = 0xc0000, scoped, tag = 'input window, operand 5, single buffered']
    #allocation11 [shape = 'u8[12288]{0}', space=vmem, size = 0x3000, scoped, tag = 'output window, operand 0, single buffered']
    %12 = vsyncpa [#allocation3], 0
    %13 = vsyncpa [#allocation6], 0
    %14 = vsyncpa [#allocation9], 0
    %15 = vsyncpa [#allocation4], 0
    // Predicated region
    $region2: #{tpu_custom_call.1} parent=1 // pred_check
      _
    $region3: #{tpu_custom_call.1} parent=1 // pred_check_branch
      %17 = sbr.rel (0) target = $region5
    $region4: #{tpu_custom_call.1} parent=1 // pred_region
      %s19 = ssub.s32 128, 128
      %20 = vsyncadd [#allocation3], %s19
      %s22 = sshll.u32 [#allocation2], 4
      %s23 = int_to_ptr.vmem [resolvable:$true] %s22
      %25 = dma.hbm_to_vmem [thread:$0]  %s0, 128, %s23, [#allocation3]
    $region5: #{tpu_custom_call.1} parent=1 // pred_fallthru
      _
    // Predicated region
    $region6: #{tpu_custom_call.1} parent=1 // pred_check
      _
    $region7: #{tpu_custom_call.1} parent=1 // pred_check_branch
      %27 = sbr.rel (0) target = $region9
    $region8: #{tpu_custom_call.1} parent=1 // pred_region
      %s29 = ssub.s32 512, 512
      %30 = vsyncadd [#allocation6], %s29
      %s31 = sshll.u32 [#allocation5], 4
      %s32 = int_to_ptr.vmem [resolvable:$true] %s31
      %37 = dma.hbm_to_vmem [thread:$0]  %s1, 512, %s32, [#allocation6], 128, 128, 8
    $region9: #{tpu_custom_call.1} parent=1 // pred_fallthru
      _
    // Predicated region
    $region10: #{tpu_custom_call.1} parent=1 // pred_check
      _
    $region11: #{tpu_custom_call.1} parent=1 // pred_check_branch
      %39 = sbr.rel (0) target = $region13
    $region12: #{tpu_custom_call.1} parent=1 // pred_region
      %s41 = ssub.s32 32, 32
      %42 = vsyncadd [#allocation6], %s41
      %s44 = sshll.u32 [#allocation7], 4
      %s45 = int_to_ptr.vmem [resolvable:$true] %s44
      %47 = dma.hbm_to_vmem [thread:$0]  %s2, 32, %s45, [#allocation6]
    $region13: #{tpu_custom_call.1} parent=1 // pred_fallthru
      _
    // Predicated region
    $region14: #{tpu_custom_call.1} parent=1 // pred_check
      _
    $region15: #{tpu_custom_call.1} parent=1 // pred_check_branch
      %49 = sbr.rel (0) target = $region17
    $region16: #{tpu_custom_call.1} parent=1 // pred_region
      %s51 = ssub.s32 8192, 8192
      %52 = vsyncadd [#allocation9], %s51
      %s53 = sshll.u32 [#allocation8], 4
      %s54 = int_to_ptr.vmem [resolvable:$true] %s53
      %59 = dma.hbm_to_vmem [thread:$0]  %s3, 8192, %s54, [#allocation9], 256, 256, 16
    $region17: #{tpu_custom_call.1} parent=1 // pred_fallthru
      _
    // Predicated region
    $region18: #{tpu_custom_call.1} parent=1 // pred_check
      _
    $region19: #{tpu_custom_call.1} parent=1 // pred_check_branch
      %61 = sbr.rel (0) target = $region21
    $region20: #{tpu_custom_call.1} parent=1 // pred_region
      _
    $region21: #{tpu_custom_call.1} parent=1 // pred_fallthru
      _
    // Predicated region
    $region22: #{tpu_custom_call.1} parent=1 // pred_check
      _
    $region23: #{tpu_custom_call.1} parent=1 // pred_check_branch
      %63 = sbr.rel (0) target = $region25
    $region24: #{tpu_custom_call.1} parent=1 // pred_region
      %s65 = ssub.s32 24576, 24576
      %66 = vsyncadd [#allocation9], %s65
      %s67 = sshll.u32 [#allocation10], 4
      %s68 = int_to_ptr.vmem [resolvable:$true] %s67
      %73 = dma.hbm_to_vmem [thread:$0]  %s5, 24576, %s68, [#allocation9], 384, 384, 24
    $region25: #{tpu_custom_call.1} parent=1 // pred_fallthru
      _
    // Predicated region
    $region26: #{tpu_custom_call.1} parent=1 // pred_check
      _
    $region27: #{tpu_custom_call.1} parent=1 // pred_check_branch
      %75 = sbr.rel (0) target = $region29
    $region28: #{tpu_custom_call.1} parent=1 // pred_region
      _
    $region29: #{tpu_custom_call.1} parent=1 // pred_fallthru
      _
    // Predicated region
    $region30: #{tpu_custom_call.1} parent=1 // pred_check
      _
    $region31: #{tpu_custom_call.1} parent=1 // pred_check_branch
      %77 = sbr.rel (0) target = $region33
    $region32: #{tpu_custom_call.1} parent=1 // pred_region
      %78 = dma.done [#allocation3], 128
    $region33: #{tpu_custom_call.1} parent=1 // pred_fallthru
      _
    // Predicated region
    $region34: #{tpu_custom_call.1} parent=1 // pred_check
      _
    $region35: #{tpu_custom_call.1} parent=1 // pred_check_branch
      %80 = sbr.rel (0) target = $region37
    $region36: #{tpu_custom_call.1} parent=1 // pred_region
      %81 = dma.done [#allocation6], 512
    $region37: #{tpu_custom_call.1} parent=1 // pred_fallthru
      _
    // Predicated region
    $region38: #{tpu_custom_call.1} parent=1 // pred_check
      _
    $region39: #{tpu_custom_call.1} parent=1 // pred_check_branch
      %83 = sbr.rel (0) target = $region41
    $region40: #{tpu_custom_call.1} parent=1 // pred_region
      %84 = dma.done [#allocation6], 32
    $region41: #{tpu_custom_call.1} parent=1 // pred_fallthru
      _
    // Predicated region
    $region42: #{tpu_custom_call.1} parent=1 // pred_check
      _
    $region43: #{tpu_custom_call.1} parent=1 // pred_check_branch
      %86 = sbr.rel (0) target = $region45
    $region44: #{tpu_custom_call.1} parent=1 // pred_region
      %87 = dma.done [#allocation9], 8192
    $region45: #{tpu_custom_call.1} parent=1 // pred_fallthru
      _
    // Predicated region
    $region46: #{tpu_custom_call.1} parent=1 // pred_check
      _
    $region47: #{tpu_custom_call.1} parent=1 // pred_check_branch
      %89 = sbr.rel (0) target = $region49
    $region48: #{tpu_custom_call.1} parent=1 // pred_region
      %90 = dma.done [#allocation9], 24576
    $region49: #{tpu_custom_call.1} parent=1 // pred_fallthru
      _
    %v92 = vld [vmem:[#allocation2] sm:$0xff]
    %v93 = vpack.c.bf16 %v92, %v92
    %v94 = vld [vmem:[#allocation5] sm:$0xff]
    %v95 = vld [vmem:[#allocation5 + $0x8] sm:$0xff]
    %v96 = vld [vmem:[#allocation5 + $0x10] sm:$0xff]
    %v97 = vld [vmem:[#allocation5 + $0x18] sm:$0xff]
    %v98 = vld [vmem:[#allocation7] sm:$0x3]
    %v100 = vlaneseq
    %v101 = vshrl.u32 %v100, 7
    %v102 = vsub.s32 0, %v101
    %v103 = vrot.slane %v98, %v102
    %v104 = vlaneseq
    %v105 = vshrl.u32 %v104, 7
    %v106 = vsub.s32 1, %v105
    %v107 = vrot.slane %v98, %v106
    %v114 = vunpack.c.l.b16 %v94
    %v115 = vunpack.c.h.b16 %v94
    %v116 = vunpack.c.l.b16 %v95
    %v117 = vunpack.c.h.b16 %v95
    %v118 = vunpack.c.l.b16 %v96
    %v119 = vunpack.c.h.b16 %v96
    %v120 = vunpack.c.l.b16 %v97
    %v121 = vunpack.c.h.b16 %v97
    %v122 = vpack.c.b16 %v116, %v114
    %v123 = vpack.c.b16 %v117, %v115
    %v124 = vpack.c.b16 %v120, %v118
    %v125 = vpack.c.b16 %v121, %v119
    %vm130 = vcmask 261120
    %v132 = vsel %vm130, %v93, 0
    %134 = vmatprep.subr.bf16.mxu0 %v123
    %135 = vmatpush1.bf16.msra.mxu0 %v122
    %136 = vmatprep.subr.bf16.mxu0 %v125
    %137 = vmatpush1.bf16.msra.mxu0 %v124
    %138 = vmatprep.subr.bf16.mxu0 0
    %139 = vmatpush1.bf16.msra.mxu0 0
    %140 = vmatprep.subr.bf16.mxu0 0
    %141 = vmatpush1.bf16.msra.mxu0 0
    %142 = vmatprep.subr.bf16.mxu0 0
    %143 = vmatpush1.bf16.msra.mxu0 0
    %144 = vmatprep.subr.bf16.mxu0 0
    %145 = vmatpush1.bf16.msra.mxu0 0
    %146 = vmatprep.subr.bf16.mxu0 0
    %147 = vmatpush1.bf16.msra.mxu0 0
    %148 = vmatprep.subr.bf16.mxu0 0
    %149 = vmatpush1.bf16.msra.mxu0 0
    %150 = vmatprep.subr.bf16.mxu0 0
    %151 = vmatpush1.bf16.msra.mxu0 0
    %152 = vmatprep.subr.bf16.mxu0 0
    %153 = vmatpush1.bf16.msra.mxu0 0
    %154 = vmatprep.subr.bf16.mxu0 0
    %155 = vmatpush1.bf16.msra.mxu0 0
    %156 = vmatprep.subr.bf16.mxu0 0
    %157 = vmatpush1.bf16.msra.mxu0 0
    %158 = vmatprep.subr.bf16.mxu0 0
    %159 = vmatpush1.bf16.msra.mxu0 0
    %160 = vmatprep.subr.bf16.mxu0 0
    %161 = vmatpush1.bf16.msra.mxu0 0
    %162 = vmatprep.subr.bf16.mxu0 0
    %163 = vmatpush1.bf16.msra.mxu0 0
    %164 = vmatprep.subr.bf16.mxu0 0
    %165 = vmatpush1.bf16.msra.mxu0 0
    %166 = vmatprep.mubr.bf16.mxu0 0
    %167 = vmatmul.mubr.bf16.gmra.mrb[0].mxu0 %v132
    %v168 = vpop.f32.mrb[0].mxu0
    %v169 = vadd.f32 %v103, %v168
    %v170 = vpop.f32.mrb[0].mxu0
    %v171 = vadd.f32 %v107, %v170
    %v172 = vpop.f32.mrb[0].mxu0
    %v173 = vpop.f32.mrb[0].mxu0
    %174 = vdwg.mxu0
    %vm175 = vcmp.gt.f32.partialorder %v169, 0.0
    %vm176 = vcmp.gt.f32.partialorder %v171, 0.0
    %v177 = vmul.f32 %v169, 0.2
    %v178 = vmul.f32 %v171, 0.2
    %v179 = vsel %vm175, %v169, %v177
    %v180 = vsel %vm176, %v171, %v178
    %v181 = vpack.c.bf16 %v179, %v179
    %v182 = vpack.c.bf16 %v180, %v180
    %v183 = vld [vmem:[#allocation8] sm:$0xff]
    %v184 = vld [vmem:[#allocation8 + $0x8] sm:$0xff]
    %v185 = vld [vmem:[#allocation8 + $0x10] sm:$0xff]
    %v186 = vld [vmem:[#allocation8 + $0x18] sm:$0xff]
    %v187 = vld [vmem:[#allocation8 + $0x20] sm:$0xff]
    %v188 = vld [vmem:[#allocation8 + $0x28] sm:$0xff]
    %v189 = vld [vmem:[#allocation8 + $0x30] sm:$0xff]
    %v190 = vld [vmem:[#allocation8 + $0x38] sm:$0xff]
    %v191 = vld [vmem:[#allocation8 + $0x40] sm:$0xff]
    %v192 = vld [vmem:[#allocation8 + $0x48] sm:$0xff]
    %v193 = vld [vmem:[#allocation8 + $0x50] sm:$0xff]
    %v194 = vld [vmem:[#allocation8 + $0x58] sm:$0xff]
    %v195 = vld [vmem:[#allocation8 + $0x60] sm:$0xff]
    %v196 = vld [vmem:[#allocation8 + $0x68] sm:$0xff]
    %v197 = vld [vmem:[#allocation8 + $0x70] sm:$0xff]
    %v198 = vld [vmem:[#allocation8 + $0x78] sm:$0xff]
    %v199 = vld [vmem:[#allocation8 + $0x80] sm:$0xff]
    %v200 = vld [vmem:[#allocation8 + $0x88] sm:$0xff]
    %v201 = vld [vmem:[#allocation8 + $0x90] sm:$0xff]
    %v202 = vld [vmem:[#allocation8 + $0x98] sm:$0xff]
    %v203 = vld [vmem:[#allocation8 + $0xa0] sm:$0xff]
    %v204 = vld [vmem:[#allocation8 + $0xa8] sm:$0xff]
    %v205 = vld [vmem:[#allocation8 + $0xb0] sm:$0xff]
    %v206 = vld [vmem:[#allocation8 + $0xb8] sm:$0xff]
    %v207 = vld [vmem:[#allocation8 + $0xc0] sm:$0xff]
    %v208 = vld [vmem:[#allocation8 + $0xc8] sm:$0xff]
    %v209 = vld [vmem:[#allocation8 + $0xd0] sm:$0xff]
    %v210 = vld [vmem:[#allocation8 + $0xd8] sm:$0xff]
    %v211 = vld [vmem:[#allocation8 + $0xe0] sm:$0xff]
    %v212 = vld [vmem:[#allocation8 + $0xe8] sm:$0xff]
    %v213 = vld [vmem:[#allocation8 + $0xf0] sm:$0xff]
    %v214 = vld [vmem:[#allocation8 + $0xf8] sm:$0xff]
    %v215 = vld [vmem:[#allocation8 + $0x100] sm:$0xff]
    %v216 = vld [vmem:[#allocation8 + $0x108] sm:$0xff]
    %v217 = vld [vmem:[#allocation8 + $0x110] sm:$0xff]
    %v218 = vld [vmem:[#allocation8 + $0x118] sm:$0xff]
    %v219 = vld [vmem:[#allocation8 + $0x120] sm:$0xff]
    %v220 = vld [vmem:[#allocation8 + $0x128] sm:$0xff]
    %v221 = vld [vmem:[#allocation8 + $0x130] sm:$0xff]
    %v222 = vld [vmem:[#allocation8 + $0x138] sm:$0xff]
    %v223 = vld [vmem:[#allocation8 + $0x140] sm:$0xff]
    %v224 = vld [vmem:[#allocation8 + $0x148] sm:$0xff]
    %v225 = vld [vmem:[#allocation8 + $0x150] sm:$0xff]
    %v226 = vld [vmem:[#allocation8 + $0x158] sm:$0xff]
    %v227 = vld [vmem:[#allocation8 + $0x160] sm:$0xff]
    %v228 = vld [vmem:[#allocation8 + $0x168] sm:$0xff]
    %v229 = vld [vmem:[#allocation8 + $0x170] sm:$0xff]
    %v230 = vld [vmem:[#allocation8 + $0x178] sm:$0xff]
    %v231 = vld [vmem:[#allocation8 + $0x180] sm:$0xff]
    %v232 = vld [vmem:[#allocation8 + $0x188] sm:$0xff]
    %v233 = vld [vmem:[#allocation8 + $0x190] sm:$0xff]
    %v234 = vld [vmem:[#allocation8 + $0x198] sm:$0xff]
    %v235 = vld [vmem:[#allocation8 + $0x1a0] sm:$0xff]
    %v236 = vld [vmem:[#allocation8 + $0x1a8] sm:$0xff]
    %v237 = vld [vmem:[#allocation8 + $0x1b0] sm:$0xff]
    %v238 = vld [vmem:[#allocation8 + $0x1b8] sm:$0xff]
    %v239 = vld [vmem:[#allocation8 + $0x1c0] sm:$0xff]
    %v240 = vld [vmem:[#allocation8 + $0x1c8] sm:$0xff]
    %v241 = vld [vmem:[#allocation8 + $0x1d0] sm:$0xff]
    %v242 = vld [vmem:[#allocation8 + $0x1d8] sm:$0xff]
    %v243 = vld [vmem:[#allocation8 + $0x1e0] sm:$0xff]
    %v244 = vld [vmem:[#allocation8 + $0x1e8] sm:$0xff]
    %v245 = vld [vmem:[#allocation8 + $0x1f0] sm:$0xff]
    %v246 = vld [vmem:[#allocation8 + $0x1f8] sm:$0xff]
    %v247 = vld [vmem:[%s4] sm:$0xf]
    %v249 = vlaneseq
    %v250 = vshrl.u32 %v249, 7
    %v251 = vsub.s32 0, %v250
    %v252 = vrot.slane %v247, %v251
    %v253 = vlaneseq
    %v254 = vshrl.u32 %v253, 7
    %v255 = vsub.s32 1, %v254
    %v256 = vrot.slane %v247, %v255
    %v257 = vlaneseq
    %v258 = vshrl.u32 %v257, 7
    %v259 = vsub.s32 2, %v258
    %v260 = vrot.slane %v247, %v259
    %v261 = vlaneseq
    %v262 = vshrl.u32 %v261, 7
    %v263 = vsub.s32 3, %v262
    %v264 = vrot.slane %v247, %v263
    %v333 = vunpack.c.l.b16 %v183
    %v334 = vunpack.c.h.b16 %v183
    %v335 = vunpack.c.l.b16 %v184
    %v336 = vunpack.c.h.b16 %v184
    %v337 = vunpack.c.l.b16 %v185
    %v338 = vunpack.c.h.b16 %v185
    %v339 = vunpack.c.l.b16 %v186
    %v340 = vunpack.c.h.b16 %v186
    %v341 = vunpack.c.l.b16 %v187
    %v342 = vunpack.c.h.b16 %v187
    %v343 = vunpack.c.l.b16 %v188
    %v344 = vunpack.c.h.b16 %v188
    %v345 = vunpack.c.l.b16 %v189
    %v346 = vunpack.c.h.b16 %v189
    %v347 = vunpack.c.l.b16 %v190
    %v348 = vunpack.c.h.b16 %v190
    %v349 = vunpack.c.l.b16 %v191
    %v350 = vunpack.c.h.b16 %v191
    %v351 = vunpack.c.l.b16 %v192
    %v352 = vunpack.c.h.b16 %v192
    %v353 = vunpack.c.l.b16 %v193
    %v354 = vunpack.c.h.b16 %v193
    %v355 = vunpack.c.l.b16 %v194
    %v356 = vunpack.c.h.b16 %v194
    %v357 = vunpack.c.l.b16 %v195
    %v358 = vunpack.c.h.b16 %v195
    %v359 = vunpack.c.l.b16 %v196
    %v360 = vunpack.c.h.b16 %v196
    %v361 = vunpack.c.l.b16 %v197
    %v362 = vunpack.c.h.b16 %v197
    %v363 = vunpack.c.l.b16 %v198
    %v364 = vunpack.c.h.b16 %v198
    %v365 = vunpack.c.l.b16 %v199
    %v366 = vunpack.c.h.b16 %v199
    %v367 = vunpack.c.l.b16 %v200
    %v368 = vunpack.c.h.b16 %v200
    %v369 = vunpack.c.l.b16 %v201
    %v370 = vunpack.c.h.b16 %v201
    %v371 = vunpack.c.l.b16 %v202
    %v372 = vunpack.c.h.b16 %v202
    %v373 = vunpack.c.l.b16 %v203
    %v374 = vunpack.c.h.b16 %v203
    %v375 = vunpack.c.l.b16 %v204
    %v376 = vunpack.c.h.b16 %v204
    %v377 = vunpack.c.l.b16 %v205
    %v378 = vunpack.c.h.b16 %v205
    %v379 = vunpack.c.l.b16 %v206
    %v380 = vunpack.c.h.b16 %v206
    %v381 = vunpack.c.l.b16 %v207
    %v382 = vunpack.c.h.b16 %v207
    %v383 = vunpack.c.l.b16 %v208
    %v384 = vunpack.c.h.b16 %v208
    %v385 = vunpack.c.l.b16 %v209
    %v386 = vunpack.c.h.b16 %v209
    %v387 = vunpack.c.l.b16 %v210
    %v388 = vunpack.c.h.b16 %v210
    %v389 = vunpack.c.l.b16 %v211
    %v390 = vunpack.c.h.b16 %v211
    %v391 = vunpack.c.l.b16 %v212
    %v392 = vunpack.c.h.b16 %v212
    %v393 = vunpack.c.l.b16 %v213
    %v394 = vunpack.c.h.b16 %v213
    %v395 = vunpack.c.l.b16 %v214
    %v396 = vunpack.c.h.b16 %v214
    %v397 = vunpack.c.l.b16 %v215
    %v398 = vunpack.c.h.b16 %v215
    %v399 = vunpack.c.l.b16 %v216
    %v400 = vunpack.c.h.b16 %v216
    %v401 = vunpack.c.l.b16 %v217
    %v402 = vunpack.c.h.b16 %v217
    %v403 = vunpack.c.l.b16 %v218
    %v404 = vunpack.c.h.b16 %v218
    %v405 = vunpack.c.l.b16 %v219
    %v406 = vunpack.c.h.b16 %v219
    %v407 = vunpack.c.l.b16 %v220
    %v408 = vunpack.c.h.b16 %v220
    %v409 = vunpack.c.l.b16 %v221
    %v410 = vunpack.c.h.b16 %v221
    %v411 = vunpack.c.l.b16 %v222
    %v412 = vunpack.c.h.b16 %v222
    %v413 = vunpack.c.l.b16 %v223
    %v414 = vunpack.c.h.b16 %v223
    %v415 = vunpack.c.l.b16 %v224
    %v416 = vunpack.c.h.b16 %v224
    %v417 = vunpack.c.l.b16 %v225
    %v418 = vunpack.c.h.b16 %v225
    %v419 = vunpack.c.l.b16 %v226
    %v420 = vunpack.c.h.b16 %v226
    %v421 = vunpack.c.l.b16 %v227
    %v422 = vunpack.c.h.b16 %v227
    %v423 = vunpack.c.l.b16 %v228
    %v424 = vunpack.c.h.b16 %v228
    %v425 = vunpack.c.l.b16 %v229
    %v426 = vunpack.c.h.b16 %v229
    %v427 = vunpack.c.l.b16 %v230
    %v428 = vunpack.c.h.b16 %v230
    %v429 = vunpack.c.l.b16 %v231
    %v430 = vunpack.c.h.b16 %v231
    %v431 = vunpack.c.l.b16 %v232
    %v432 = vunpack.c.h.b16 %v232
    %v433 = vunpack.c.l.b16 %v233
    %v434 = vunpack.c.h.b16 %v233
    %v435 = vunpack.c.l.b16 %v234
    %v436 = vunpack.c.h.b16 %v234
    %v437 = vunpack.c.l.b16 %v235
    %v438 = vunpack.c.h.b16 %v235
    %v439 = vunpack.c.l.b16 %v236
    %v440 = vunpack.c.h.b16 %v236
    %v441 = vunpack.c.l.b16 %v237
    %v442 = vunpack.c.h.b16 %v237
    %v443 = vunpack.c.l.b16 %v238
    %v444 = vunpack.c.h.b16 %v238
    %v445 = vunpack.c.l.b16 %v239
    %v446 = vunpack.c.h.b16 %v239
    %v447 = vunpack.c.l.b16 %v240
    %v448 = vunpack.c.h.b16 %v240
    %v449 = vunpack.c.l.b16 %v241
    %v450 = vunpack.c.h.b16 %v241
    %v451 = vunpack.c.l.b16 %v242
    %v452 = vunpack.c.h.b16 %v242
    %v453 = vunpack.c.l.b16 %v243
    %v454 = vunpack.c.h.b16 %v243
    %v455 = vunpack.c.l.b16 %v244
    %v456 = vunpack.c.h.b16 %v244
    %v457 = vunpack.c.l.b16 %v245
    %v458 = vunpack.c.h.b16 %v245
    %v459 = vunpack.c.l.b16 %v246
    %v460 = vunpack.c.h.b16 %v246
    %v461 = vpack.c.b16 %v337, %v333
    %v462 = vpack.c.b16 %v338, %v334
    %v463 = vpack.c.b16 %v339, %v335
    %v464 = vpack.c.b16 %v340, %v336
    %v465 = vpack.c.b16 %v345, %v341
    %v466 = vpack.c.b16 %v346, %v342
    %v467 = vpack.c.b16 %v347, %v343
    %v468 = vpack.c.b16 %v348, %v344
    %v469 = vpack.c.b16 %v353, %v349
    %v470 = vpack.c.b16 %v354, %v350
    %v471 = vpack.c.b16 %v355, %v351
    %v472 = vpack.c.b16 %v356, %v352
    %v473 = vpack.c.b16 %v361, %v357
    %v474 = vpack.c.b16 %v362, %v358
    %v475 = vpack.c.b16 %v363, %v359
    %v476 = vpack.c.b16 %v364, %v360
    %v477 = vpack.c.b16 %v369, %v365
    %v478 = vpack.c.b16 %v370, %v366
    %v479 = vpack.c.b16 %v371, %v367
    %v480 = vpack.c.b16 %v372, %v368
    %v481 = vpack.c.b16 %v377, %v373
    %v482 = vpack.c.b16 %v378, %v374
    %v483 = vpack.c.b16 %v379, %v375
    %v484 = vpack.c.b16 %v380, %v376
    %v485 = vpack.c.b16 %v385, %v381
    %v486 = vpack.c.b16 %v386, %v382
    %v487 = vpack.c.b16 %v387, %v383
    %v488 = vpack.c.b16 %v388, %v384
    %v489 = vpack.c.b16 %v393, %v389
    %v490 = vpack.c.b16 %v394, %v390
    %v491 = vpack.c.b16 %v395, %v391
    %v492 = vpack.c.b16 %v396, %v392
    %v493 = vpack.c.b16 %v401, %v397
    %v494 = vpack.c.b16 %v402, %v398
    %v495 = vpack.c.b16 %v403, %v399
    %v496 = vpack.c.b16 %v404, %v400
    %v497 = vpack.c.b16 %v409, %v405
    %v498 = vpack.c.b16 %v410, %v406
    %v499 = vpack.c.b16 %v411, %v407
    %v500 = vpack.c.b16 %v412, %v408
    %v501 = vpack.c.b16 %v417, %v413
    %v502 = vpack.c.b16 %v418, %v414
    %v503 = vpack.c.b16 %v419, %v415
    %v504 = vpack.c.b16 %v420, %v416
    %v505 = vpack.c.b16 %v425, %v421
    %v506 = vpack.c.b16 %v426, %v422
    %v507 = vpack.c.b16 %v427, %v423
    %v508 = vpack.c.b16 %v428, %v424
    %v509 = vpack.c.b16 %v433, %v429
    %v510 = vpack.c.b16 %v434, %v430
    %v511 = vpack.c.b16 %v435, %v431
    %v512 = vpack.c.b16 %v436, %v432
    %v513 = vpack.c.b16 %v441, %v437
    %v514 = vpack.c.b16 %v442, %v438
    %v515 = vpack.c.b16 %v443, %v439
    %v516 = vpack.c.b16 %v444, %v440
    %v517 = vpack.c.b16 %v449, %v445
    %v518 = vpack.c.b16 %v450, %v446
    %v519 = vpack.c.b16 %v451, %v447
    %v520 = vpack.c.b16 %v452, %v448
    %v521 = vpack.c.b16 %v457, %v453
    %v522 = vpack.c.b16 %v458, %v454
    %v523 = vpack.c.b16 %v459, %v455
    %v524 = vpack.c.b16 %v460, %v456
    %589 = vmatprep.subr.bf16.mxu0 %v462
    %590 = vmatpush1.bf16.msra.mxu0 %v461
    %591 = vmatprep.subr.bf16.mxu0 %v466
    %592 = vmatpush1.bf16.msra.mxu0 %v465
    %593 = vmatprep.subr.bf16.mxu0 %v470
    %594 = vmatpush1.bf16.msra.mxu0 %v469
    %595 = vmatprep.subr.bf16.mxu0 %v474
    %596 = vmatpush1.bf16.msra.mxu0 %v473
    %597 = vmatprep.subr.bf16.mxu0 %v478
    %598 = vmatpush1.bf16.msra.mxu0 %v477
    %599 = vmatprep.subr.bf16.mxu0 %v482
    %600 = vmatpush1.bf16.msra.mxu0 %v481
    %601 = vmatprep.subr.bf16.mxu0 %v486
    %602 = vmatpush1.bf16.msra.mxu0 %v485
    %603 = vmatprep.subr.bf16.mxu0 %v490
    %604 = vmatpush1.bf16.msra.mxu0 %v489
    %605 = vmatprep.subr.bf16.mxu0 %v494
    %606 = vmatpush1.bf16.msra.mxu0 %v493
    %607 = vmatprep.subr.bf16.mxu0 %v498
    %608 = vmatpush1.bf16.msra.mxu0 %v497
    %609 = vmatprep.subr.bf16.mxu0 %v502
    %610 = vmatpush1.bf16.msra.mxu0 %v501
    %611 = vmatprep.subr.bf16.mxu0 %v506
    %612 = vmatpush1.bf16.msra.mxu0 %v505
    %613 = vmatprep.subr.bf16.mxu0 %v510
    %614 = vmatpush1.bf16.msra.mxu0 %v509
    %615 = vmatprep.subr.bf16.mxu0 %v514
    %616 = vmatpush1.bf16.msra.mxu0 %v513
    %617 = vmatprep.subr.bf16.mxu0 %v518
    %618 = vmatpush1.bf16.msra.mxu0 %v517
    %619 = vmatprep.subr.bf16.mxu0 %v522
    %620 = vmatpush1.bf16.msra.mxu0 %v521
    %621 = vmatprep.mubr.bf16.mxu0 %v182
    %622 = vmatmul.mubr.bf16.gmra.mrb[0].mxu0 %v181
    %v623 = vpop.f32.mrb[0].mxu0
    %v624 = vadd.f32 %v252, %v623
    %v625 = vpop.f32.mrb[0].mxu0
    %v626 = vadd.f32 %v256, %v625
    %v627 = vpop.f32.mrb[0].mxu0
    %v628 = vpop.f32.mrb[0].mxu0
    %629 = vdwg.mxu0
    %630 = vmatprep.subr.bf16.mxu0 %v464
    %631 = vmatpush1.bf16.msra.mxu0 %v463
    %632 = vmatprep.subr.bf16.mxu0 %v468
    %633 = vmatpush1.bf16.msra.mxu0 %v467
    %634 = vmatprep.subr.bf16.mxu0 %v472
    %635 = vmatpush1.bf16.msra.mxu0 %v471
    %636 = vmatprep.subr.bf16.mxu0 %v476
    %637 = vmatpush1.bf16.msra.mxu0 %v475
    %638 = vmatprep.subr.bf16.mxu0 %v480
    %639 = vmatpush1.bf16.msra.mxu0 %v479
    %640 = vmatprep.subr.bf16.mxu0 %v484
    %641 = vmatpush1.bf16.msra.mxu0 %v483
    %642 = vmatprep.subr.bf16.mxu0 %v488
    %643 = vmatpush1.bf16.msra.mxu0 %v487
    %644 = vmatprep.subr.bf16.mxu0 %v492
    %645 = vmatpush1.bf16.msra.mxu0 %v491
    %646 = vmatprep.subr.bf16.mxu0 %v496
    %647 = vmatpush1.bf16.msra.mxu0 %v495
    %648 = vmatprep.subr.bf16.mxu0 %v500
    %649 = vmatpush1.bf16.msra.mxu0 %v499
    %650 = vmatprep.subr.bf16.mxu0 %v504
    %651 = vmatpush1.bf16.msra.mxu0 %v503
    %652 = vmatprep.subr.bf16.mxu0 %v508
    %653 = vmatpush1.bf16.msra.mxu0 %v507
    %654 = vmatprep.subr.bf16.mxu0 %v512
    %655 = vmatpush1.bf16.msra.mxu0 %v511
    %656 = vmatprep.subr.bf16.mxu0 %v516
    %657 = vmatpush1.bf16.msra.mxu0 %v515
    %658 = vmatprep.subr.bf16.mxu0 %v520
    %659 = vmatpush1.bf16.msra.mxu0 %v519
    %660 = vmatprep.subr.bf16.mxu0 %v524
    %661 = vmatpush1.bf16.msra.mxu0 %v523
    %662 = vmatprep.mubr.bf16.mxu0 %v182
    %663 = vmatmul.mubr.bf16.gmra.mrb[0].mxu0 %v181
    %v664 = vpop.f32.mrb[0].mxu0
    %v665 = vadd.f32 %v260, %v664
    %v666 = vpop.f32.mrb[0].mxu0
    %v667 = vadd.f32 %v264, %v666
    %v668 = vpop.f32.mrb[0].mxu0
    %v669 = vpop.f32.mrb[0].mxu0
    %670 = vdwg.mxu0
    %vm671 = vcmp.gt.f32.partialorder %v624, 0.0
    %vm672 = vcmp.gt.f32.partialorder %v626, 0.0
    %vm673 = vcmp.gt.f32.partialorder %v665, 0.0
    %vm674 = vcmp.gt.f32.partialorder %v667, 0.0
    %v675 = vmul.f32 %v624, 0.2
    %v676 = vmul.f32 %v626, 0.2
    %v677 = vmul.f32 %v665, 0.2
    %v678 = vmul.f32 %v667, 0.2
    %v679 = vsel %vm671, %v624, %v675
    %v680 = vsel %vm672, %v626, %v676
    %v681 = vsel %vm673, %v665, %v677
    %v682 = vsel %vm674, %v667, %v678
    %v683 = vpack.c.bf16 %v679, %v679
    %v684 = vpack.c.bf16 %v680, %v680
    %v685 = vpack.c.bf16 %v681, %v681
    %v686 = vpack.c.bf16 %v682, %v682
    %v687 = vld [vmem:[#allocation10] sm:$0xff]
    %v688 = vld [vmem:[#allocation10 + $0x8] sm:$0xff]
    %v689 = vld [vmem:[#allocation10 + $0x10] sm:$0xff]
    %v690 = vld [vmem:[#allocation10 + $0x18] sm:$0xff]
    %v691 = vld [vmem:[#allocation10 + $0x20] sm:$0xff]
    %v692 = vld [vmem:[#allocation10 + $0x28] sm:$0xff]
    %v693 = vld [vmem:[#allocation10 + $0x30] sm:$0xff]
    %v694 = vld [vmem:[#allocation10 + $0x38] sm:$0xff]
    %v695 = vld [vmem:[#allocation10 + $0x40] sm:$0xff]
    %v696 = vld [vmem:[#allocation10 + $0x48] sm:$0xff]
    %v697 = vld [vmem:[#allocation10 + $0x50] sm:$0xff]
    %v698 = vld [vmem:[#allocation10 + $0x58] sm:$0xff]
    %v699 = vld [vmem:[#allocation10 + $0x60] sm:$0xff]
    %v700 = vld [vmem:[#allocation10 + $0x68] sm:$0xff]
    %v701 = vld [vmem:[#allocation10 + $0x70] sm:$0xff]
    %v702 = vld [vmem:[#allocation10 + $0x78] sm:$0xff]
    %v703 = vld [vmem:[#allocation10 + $0x80] sm:$0xff]
    %v704 = vld [vmem:[#allocation10 + $0x88] sm:$0xff]
    %v705 = vld [vmem:[#allocation10 + $0x90] sm:$0xff]
    %v706 = vld [vmem:[#allocation10 + $0x98] sm:$0xff]
    %v707 = vld [vmem:[#allocation10 + $0xa0] sm:$0xff]
    %v708 = vld [vmem:[#allocation10 + $0xa8] sm:$0xff]
    %v709 = vld [vmem:[#allocation10 + $0xb0] sm:$0xff]
    %v710 = vld [vmem:[#allocation10 + $0xb8] sm:$0xff]
    %v711 = vld [vmem:[#allocation10 + $0xc0] sm:$0xff]
    %v712 = vld [vmem:[#allocation10 + $0xc8] sm:$0xff]
    %v713 = vld [vmem:[#allocation10 + $0xd0] sm:$0xff]
    %v714 = vld [vmem:[#allocation10 + $0xd8] sm:$0xff]
    %v715 = vld [vmem:[#allocation10 + $0xe0] sm:$0xff]
    %v716 = vld [vmem:[#allocation10 + $0xe8] sm:$0xff]
    %v717 = vld [vmem:[#allocation10 + $0xf0] sm:$0xff]
    %v718 = vld [vmem:[#allocation10 + $0xf8] sm:$0xff]
    %v719 = vld [vmem:[#allocation10 + $0x100] sm:$0xff]
    %v720 = vld [vmem:[#allocation10 + $0x108] sm:$0xff]
    %v721 = vld [vmem:[#allocation10 + $0x110] sm:$0xff]
    %v722 = vld [vmem:[#allocation10 + $0x118] sm:$0xff]
    %v723 = vld [vmem:[#allocation10 + $0x120] sm:$0xff]
    %v724 = vld [vmem:[#allocation10 + $0x128] sm:$0xff]
    %v725 = vld [vmem:[#allocation10 + $0x130] sm:$0xff]
    %v726 = vld [vmem:[#allocation10 + $0x138] sm:$0xff]
    %v727 = vld [vmem:[#allocation10 + $0x140] sm:$0xff]
    %v728 = vld [vmem:[#allocation10 + $0x148] sm:$0xff]
    %v729 = vld [vmem:[#allocation10 + $0x150] sm:$0xff]
    %v730 = vld [vmem:[#allocation10 + $0x158] sm:$0xff]
    %v731 = vld [vmem:[#allocation10 + $0x160] sm:$0xff]
    %v732 = vld [vmem:[#allocation10 + $0x168] sm:$0xff]
    %v733 = vld [vmem:[#allocation10 + $0x170] sm:$0xff]
    %v734 = vld [vmem:[#allocation10 + $0x178] sm:$0xff]
    %v735 = vld [vmem:[#allocation10 + $0x180] sm:$0xff]
    %v736 = vld [vmem:[#allocation10 + $0x188] sm:$0xff]
    %v737 = vld [vmem:[#allocation10 + $0x190] sm:$0xff]
    %v738 = vld [vmem:[#allocation10 + $0x198] sm:$0xff]
    %v739 = vld [vmem:[#allocation10 + $0x1a0] sm:$0xff]
    %v740 = vld [vmem:[#allocation10 + $0x1a8] sm:$0xff]
    %v741 = vld [vmem:[#allocation10 + $0x1b0] sm:$0xff]
    %v742 = vld [vmem:[#allocation10 + $0x1b8] sm:$0xff]
    %v743 = vld [vmem:[#allocation10 + $0x1c0] sm:$0xff]
    %v744 = vld [vmem:[#allocation10 + $0x1c8] sm:$0xff]
    %v745 = vld [vmem:[#allocation10 + $0x1d0] sm:$0xff]
    %v746 = vld [vmem:[#allocation10 + $0x1d8] sm:$0xff]
    %v747 = vld [vmem:[#allocation10 + $0x1e0] sm:$0xff]
    %v748 = vld [vmem:[#allocation10 + $0x1e8] sm:$0xff]
    %v749 = vld [vmem:[#allocation10 + $0x1f0] sm:$0xff]
    %v750 = vld [vmem:[#allocation10 + $0x1f8] sm:$0xff]
    %v751 = vld [vmem:[#allocation10 + $0x200] sm:$0xff]
    %v752 = vld [vmem:[#allocation10 + $0x208] sm:$0xff]
    %v753 = vld [vmem:[#allocation10 + $0x210] sm:$0xff]
    %v754 = vld [vmem:[#allocation10 + $0x218] sm:$0xff]
    %v755 = vld [vmem:[#allocation10 + $0x220] sm:$0xff]
    %v756 = vld [vmem:[#allocation10 + $0x228] sm:$0xff]
    %v757 = vld [vmem:[#allocation10 + $0x230] sm:$0xff]
    %v758 = vld [vmem:[#allocation10 + $0x238] sm:$0xff]
    %v759 = vld [vmem:[#allocation10 + $0x240] sm:$0xff]
    %v760 = vld [vmem:[#allocation10 + $0x248] sm:$0xff]
    %v761 = vld [vmem:[#allocation10 + $0x250] sm:$0xff]
    %v762 = vld [vmem:[#allocation10 + $0x258] sm:$0xff]
    %v763 = vld [vmem:[#allocation10 + $0x260] sm:$0xff]
    %v764 = vld [vmem:[#allocation10 + $0x268] sm:$0xff]
    %v765 = vld [vmem:[#allocation10 + $0x270] sm:$0xff]
    %v766 = vld [vmem:[#allocation10 + $0x278] sm:$0xff]
    %v767 = vld [vmem:[#allocation10 + $0x280] sm:$0xff]
    %v768 = vld [vmem:[#allocation10 + $0x288] sm:$0xff]
    %v769 = vld [vmem:[#allocation10 + $0x290] sm:$0xff]
    %v770 = vld [vmem:[#allocation10 + $0x298] sm:$0xff]
    %v771 = vld [vmem:[#allocation10 + $0x2a0] sm:$0xff]
    %v772 = vld [vmem:[#allocation10 + $0x2a8] sm:$0xff]
    %v773 = vld [vmem:[#allocation10 + $0x2b0] sm:$0xff]
    %v774 = vld [vmem:[#allocation10 + $0x2b8] sm:$0xff]
    %v775 = vld [vmem:[#allocation10 + $0x2c0] sm:$0xff]
    %v776 = vld [vmem:[#allocation10 + $0x2c8] sm:$0xff]
    %v777 = vld [vmem:[#allocation10 + $0x2d0] sm:$0xff]
    %v778 = vld [vmem:[#allocation10 + $0x2d8] sm:$0xff]
    %v779 = vld [vmem:[#allocation10 + $0x2e0] sm:$0xff]
    %v780 = vld [vmem:[#allocation10 + $0x2e8] sm:$0xff]
    %v781 = vld [vmem:[#allocation10 + $0x2f0] sm:$0xff]
    %v782 = vld [vmem:[#allocation10 + $0x2f8] sm:$0xff]
    %v783 = vld [vmem:[#allocation10 + $0x300] sm:$0xff]
    %v784 = vld [vmem:[#allocation10 + $0x308] sm:$0xff]
    %v785 = vld [vmem:[#allocation10 + $0x310] sm:$0xff]
    %v786 = vld [vmem:[#allocation10 + $0x318] sm:$0xff]
    %v787 = vld [vmem:[#allocation10 + $0x320] sm:$0xff]
    %v788 = vld [vmem:[#allocation10 + $0x328] sm:$0xff]
    %v789 = vld [vmem:[#allocation10 + $0x330] sm:$0xff]
    %v790 = vld [vmem:[#allocation10 + $0x338] sm:$0xff]
    %v791 = vld [vmem:[#allocation10 + $0x340] sm:$0xff]
    %v792 = vld [vmem:[#allocation10 + $0x348] sm:$0xff]
    %v793 = vld [vmem:[#allocation10 + $0x350] sm:$0xff]
    %v794 = vld [vmem:[#allocation10 + $0x358] sm:$0xff]
    %v795 = vld [vmem:[#allocation10 + $0x360] sm:$0xff]
    %v796 = vld [vmem:[#allocation10 + $0x368] sm:$0xff]
    %v797 = vld [vmem:[#allocation10 + $0x370] sm:$0xff]
    %v798 = vld [vmem:[#allocation10 + $0x378] sm:$0xff]
    %v799 = vld [vmem:[#allocation10 + $0x380] sm:$0xff]
    %v800 = vld [vmem:[#allocation10 + $0x388] sm:$0xff]
    %v801 = vld [vmem:[#allocation10 + $0x390] sm:$0xff]
    %v802 = vld [vmem:[#allocation10 + $0x398] sm:$0xff]
    %v803 = vld [vmem:[#allocation10 + $0x3a0] sm:$0xff]
    %v804 = vld [vmem:[#allocation10 + $0x3a8] sm:$0xff]
    %v805 = vld [vmem:[#allocation10 + $0x3b0] sm:$0xff]
    %v806 = vld [vmem:[#allocation10 + $0x3b8] sm:$0xff]
    %v807 = vld [vmem:[#allocation10 + $0x3c0] sm:$0xff]
    %v808 = vld [vmem:[#allocation10 + $0x3c8] sm:$0xff]
    %v809 = vld [vmem:[#allocation10 + $0x3d0] sm:$0xff]
    %v810 = vld [vmem:[#allocation10 + $0x3d8] sm:$0xff]
    %v811 = vld [vmem:[#allocation10 + $0x3e0] sm:$0xff]
    %v812 = vld [vmem:[#allocation10 + $0x3e8] sm:$0xff]
    %v813 = vld [vmem:[#allocation10 + $0x3f0] sm:$0xff]
    %v814 = vld [vmem:[#allocation10 + $0x3f8] sm:$0xff]
    %v815 = vld [vmem:[#allocation10 + $0x400] sm:$0xff]
    %v816 = vld [vmem:[#allocation10 + $0x408] sm:$0xff]
    %v817 = vld [vmem:[#allocation10 + $0x410] sm:$0xff]
    %v818 = vld [vmem:[#allocation10 + $0x418] sm:$0xff]
    %v819 = vld [vmem:[#allocation10 + $0x420] sm:$0xff]
    %v820 = vld [vmem:[#allocation10 + $0x428] sm:$0xff]
    %v821 = vld [vmem:[#allocation10 + $0x430] sm:$0xff]
    %v822 = vld [vmem:[#allocation10 + $0x438] sm:$0xff]
    %v823 = vld [vmem:[#allocation10 + $0x440] sm:$0xff]
    %v824 = vld [vmem:[#allocation10 + $0x448] sm:$0xff]
    %v825 = vld [vmem:[#allocation10 + $0x450] sm:$0xff]
    %v826 = vld [vmem:[#allocation10 + $0x458] sm:$0xff]
    %v827 = vld [vmem:[#allocation10 + $0x460] sm:$0xff]
    %v828 = vld [vmem:[#allocation10 + $0x468] sm:$0xff]
    %v829 = vld [vmem:[#allocation10 + $0x470] sm:$0xff]
    %v830 = vld [vmem:[#allocation10 + $0x478] sm:$0xff]
    %v831 = vld [vmem:[#allocation10 + $0x480] sm:$0xff]
    %v832 = vld [vmem:[#allocation10 + $0x488] sm:$0xff]
    %v833 = vld [vmem:[#allocation10 + $0x490] sm:$0xff]
    %v834 = vld [vmem:[#allocation10 + $0x498] sm:$0xff]
    %v835 = vld [vmem:[#allocation10 + $0x4a0] sm:$0xff]
    %v836 = vld [vmem:[#allocation10 + $0x4a8] sm:$0xff]
    %v837 = vld [vmem:[#allocation10 + $0x4b0] sm:$0xff]
    %v838 = vld [vmem:[#allocation10 + $0x4b8] sm:$0xff]
    %v839 = vld [vmem:[#allocation10 + $0x4c0] sm:$0xff]
    %v840 = vld [vmem:[#allocation10 + $0x4c8] sm:$0xff]
    %v841 = vld [vmem:[#allocation10 + $0x4d0] sm:$0xff]
    %v842 = vld [vmem:[#allocation10 + $0x4d8] sm:$0xff]
    %v843 = vld [vmem:[#allocation10 + $0x4e0] sm:$0xff]
    %v844 = vld [vmem:[#allocation10 + $0x4e8] sm:$0xff]
    %v845 = vld [vmem:[#allocation10 + $0x4f0] sm:$0xff]
    %v846 = vld [vmem:[#allocation10 + $0x4f8] sm:$0xff]
    %v847 = vld [vmem:[#allocation10 + $0x500] sm:$0xff]
    %v848 = vld [vmem:[#allocation10 + $0x508] sm:$0xff]
    %v849 = vld [vmem:[#allocation10 + $0x510] sm:$0xff]
    %v850 = vld [vmem:[#allocation10 + $0x518] sm:$0xff]
    %v851 = vld [vmem:[#allocation10 + $0x520] sm:$0xff]
    %v852 = vld [vmem:[#allocation10 + $0x528] sm:$0xff]
    %v853 = vld [vmem:[#allocation10 + $0x530] sm:$0xff]
    %v854 = vld [vmem:[#allocation10 + $0x538] sm:$0xff]
    %v855 = vld [vmem:[#allocation10 + $0x540] sm:$0xff]
    %v856 = vld [vmem:[#allocation10 + $0x548] sm:$0xff]
    %v857 = vld [vmem:[#allocation10 + $0x550] sm:$0xff]
    %v858 = vld [vmem:[#allocation10 + $0x558] sm:$0xff]
    %v859 = vld [vmem:[#allocation10 + $0x560] sm:$0xff]
    %v860 = vld [vmem:[#allocation10 + $0x568] sm:$0xff]
    %v861 = vld [vmem:[#allocation10 + $0x570] sm:$0xff]
    %v862 = vld [vmem:[#allocation10 + $0x578] sm:$0xff]
    %v863 = vld [vmem:[#allocation10 + $0x580] sm:$0xff]
    %v864 = vld [vmem:[#allocation10 + $0x588] sm:$0xff]
    %v865 = vld [vmem:[#allocation10 + $0x590] sm:$0xff]
    %v866 = vld [vmem:[#allocation10 + $0x598] sm:$0xff]
    %v867 = vld [vmem:[#allocation10 + $0x5a0] sm:$0xff]
    %v868 = vld [vmem:[#allocation10 + $0x5a8] sm:$0xff]
    %v869 = vld [vmem:[#allocation10 + $0x5b0] sm:$0xff]
    %v870 = vld [vmem:[#allocation10 + $0x5b8] sm:$0xff]
    %v871 = vld [vmem:[#allocation10 + $0x5c0] sm:$0xff]
    %v872 = vld [vmem:[#allocation10 + $0x5c8] sm:$0xff]
    %v873 = vld [vmem:[#allocation10 + $0x5d0] sm:$0xff]
    %v874 = vld [vmem:[#allocation10 + $0x5d8] sm:$0xff]
    %v875 = vld [vmem:[#allocation10 + $0x5e0] sm:$0xff]
    %v876 = vld [vmem:[#allocation10 + $0x5e8] sm:$0xff]
    %v877 = vld [vmem:[#allocation10 + $0x5f0] sm:$0xff]
    %v878 = vld [vmem:[#allocation10 + $0x5f8] sm:$0xff]
    %v879 = vld [vmem:[%s6] sm:$0x3f]
    %v881 = vlaneseq
    %v882 = vshrl.u32 %v881, 7
    %v883 = vsub.s32 0, %v882
    %v884 = vrot.slane %v879, %v883
    %v885 = vlaneseq
    %v886 = vshrl.u32 %v885, 7
    %v887 = vsub.s32 1, %v886
    %v888 = vrot.slane %v879, %v887
    %v889 = vlaneseq
    %v890 = vshrl.u32 %v889, 7
    %v891 = vsub.s32 2, %v890
    %v892 = vrot.slane %v879, %v891
    %v893 = vlaneseq
    %v894 = vshrl.u32 %v893, 7
    %v895 = vsub.s32 3, %v894
    %v896 = vrot.slane %v879, %v895
    %v897 = vlaneseq
    %v898 = vshrl.u32 %v897, 7
    %v899 = vsub.s32 4, %v898
    %v900 = vrot.slane %v879, %v899
    %v901 = vlaneseq
    %v902 = vshrl.u32 %v901, 7
    %v903 = vsub.s32 5, %v902
    %v904 = vrot.slane %v879, %v903
    %v1103 = vunpack.c.l.b16 %v687
    %v1104 = vunpack.c.h.b16 %v687
    %v1105 = vunpack.c.l.b16 %v688
    %v1106 = vunpack.c.h.b16 %v688
    %v1107 = vunpack.c.l.b16 %v689
    %v1108 = vunpack.c.h.b16 %v689
    %v1109 = vunpack.c.l.b16 %v690
    %v1110 = vunpack.c.h.b16 %v690
    %v1111 = vunpack.c.l.b16 %v691
    %v1112 = vunpack.c.h.b16 %v691
    %v1113 = vunpack.c.l.b16 %v692
    %v1114 = vunpack.c.h.b16 %v692
    %v1115 = vunpack.c.l.b16 %v693
    %v1116 = vunpack.c.h.b16 %v693
    %v1117 = vunpack.c.l.b16 %v694
    %v1118 = vunpack.c.h.b16 %v694
    %v1119 = vunpack.c.l.b16 %v695
    %v1120 = vunpack.c.h.b16 %v695
    %v1121 = vunpack.c.l.b16 %v696
    %v1122 = vunpack.c.h.b16 %v696
    %v1123 = vunpack.c.l.b16 %v697
    %v1124 = vunpack.c.h.b16 %v697
    %v1125 = vunpack.c.l.b16 %v698
    %v1126 = vunpack.c.h.b16 %v698
    %v1127 = vunpack.c.l.b16 %v699
    %v1128 = vunpack.c.h.b16 %v699
    %v1129 = vunpack.c.l.b16 %v700
    %v1130 = vunpack.c.h.b16 %v700
    %v1131 = vunpack.c.l.b16 %v701
    %v1132 = vunpack.c.h.b16 %v701
    %v1133 = vunpack.c.l.b16 %v702
    %v1134 = vunpack.c.h.b16 %v702
    %v1135 = vunpack.c.l.b16 %v703
    %v1136 = vunpack.c.h.b16 %v703
    %v1137 = vunpack.c.l.b16 %v704
    %v1138 = vunpack.c.h.b16 %v704
    %v1139 = vunpack.c.l.b16 %v705
    %v1140 = vunpack.c.h.b16 %v705
    %v1141 = vunpack.c.l.b16 %v706
    %v1142 = vunpack.c.h.b16 %v706
    %v1143 = vunpack.c.l.b16 %v707
    %v1144 = vunpack.c.h.b16 %v707
    %v1145 = vunpack.c.l.b16 %v708
    %v1146 = vunpack.c.h.b16 %v708
    %v1147 = vunpack.c.l.b16 %v709
    %v1148 = vunpack.c.h.b16 %v709
    %v1149 = vunpack.c.l.b16 %v710
    %v1150 = vunpack.c.h.b16 %v710
    %v1151 = vunpack.c.l.b16 %v711
    %v1152 = vunpack.c.h.b16 %v711
    %v1153 = vunpack.c.l.b16 %v712
    %v1154 = vunpack.c.h.b16 %v712
    %v1155 = vunpack.c.l.b16 %v713
    %v1156 = vunpack.c.h.b16 %v713
    %v1157 = vunpack.c.l.b16 %v714
    %v1158 = vunpack.c.h.b16 %v714
    %v1159 = vunpack.c.l.b16 %v715
    %v1160 = vunpack.c.h.b16 %v715
    %v1161 = vunpack.c.l.b16 %v716
    %v1162 = vunpack.c.h.b16 %v716
    %v1163 = vunpack.c.l.b16 %v717
    %v1164 = vunpack.c.h.b16 %v717
    %v1165 = vunpack.c.l.b16 %v718
    %v1166 = vunpack.c.h.b16 %v718
    %v1167 = vunpack.c.l.b16 %v719
    %v1168 = vunpack.c.h.b16 %v719
    %v1169 = vunpack.c.l.b16 %v720
    %v1170 = vunpack.c.h.b16 %v720
    %v1171 = vunpack.c.l.b16 %v721
    %v1172 = vunpack.c.h.b16 %v721
    %v1173 = vunpack.c.l.b16 %v722
    %v1174 = vunpack.c.h.b16 %v722
    %v1175 = vunpack.c.l.b16 %v723
    %v1176 = vunpack.c.h.b16 %v723
    %v1177 = vunpack.c.l.b16 %v724
    %v1178 = vunpack.c.h.b16 %v724
    %v1179 = vunpack.c.l.b16 %v725
    %v1180 = vunpack.c.h.b16 %v725
    %v1181 = vunpack.c.l.b16 %v726
    %v1182 = vunpack.c.h.b16 %v726
    %v1183 = vunpack.c.l.b16 %v727
    %v1184 = vunpack.c.h.b16 %v727
    %v1185 = vunpack.c.l.b16 %v728
    %v1186 = vunpack.c.h.b16 %v728
    %v1187 = vunpack.c.l.b16 %v729
    %v1188 = vunpack.c.h.b16 %v729
    %v1189 = vunpack.c.l.b16 %v730
    %v1190 = vunpack.c.h.b16 %v730
    %v1191 = vunpack.c.l.b16 %v731
    %v1192 = vunpack.c.h.b16 %v731
    %v1193 = vunpack.c.l.b16 %v732
    %v1194 = vunpack.c.h.b16 %v732
    %v1195 = vunpack.c.l.b16 %v733
    %v1196 = vunpack.c.h.b16 %v733
    %v1197 = vunpack.c.l.b16 %v734
    %v1198 = vunpack.c.h.b16 %v734
    %v1199 = vunpack.c.l.b16 %v735
    %v1200 = vunpack.c.h.b16 %v735
    %v1201 = vunpack.c.l.b16 %v736
    %v1202 = vunpack.c.h.b16 %v736
    %v1203 = vunpack.c.l.b16 %v737
    %v1204 = vunpack.c.h.b16 %v737
    %v1205 = vunpack.c.l.b16 %v738
    %v1206 = vunpack.c.h.b16 %v738
    %v1207 = vunpack.c.l.b16 %v739
    %v1208 = vunpack.c.h.b16 %v739
    %v1209 = vunpack.c.l.b16 %v740
    %v1210 = vunpack.c.h.b16 %v740
    %v1211 = vunpack.c.l.b16 %v741
    %v1212 = vunpack.c.h.b16 %v741
    %v1213 = vunpack.c.l.b16 %v742
    %v1214 = vunpack.c.h.b16 %v742
    %v1215 = vunpack.c.l.b16 %v743
    %v1216 = vunpack.c.h.b16 %v743
    %v1217 = vunpack.c.l.b16 %v744
    %v1218 = vunpack.c.h.b16 %v744
    %v1219 = vunpack.c.l.b16 %v745
    %v1220 = vunpack.c.h.b16 %v745
    %v1221 = vunpack.c.l.b16 %v746
    %v1222 = vunpack.c.h.b16 %v746
    %v1223 = vunpack.c.l.b16 %v747
    %v1224 = vunpack.c.h.b16 %v747
    %v1225 = vunpack.c.l.b16 %v748
    %v1226 = vunpack.c.h.b16 %v748
    %v1227 = vunpack.c.l.b16 %v749
    %v1228 = vunpack.c.h.b16 %v749
    %v1229 = vunpack.c.l.b16 %v750
    %v1230 = vunpack.c.h.b16 %v750
    %v1231 = vunpack.c.l.b16 %v751
    %v1232 = vunpack.c.h.b16 %v751
    %v1233 = vunpack.c.l.b16 %v752
    %v1234 = vunpack.c.h.b16 %v752
    %v1235 = vunpack.c.l.b16 %v753
    %v1236 = vunpack.c.h.b16 %v753
    %v1237 = vunpack.c.l.b16 %v754
    %v1238 = vunpack.c.h.b16 %v754
    %v1239 = vunpack.c.l.b16 %v755
    %v1240 = vunpack.c.h.b16 %v755
    %v1241 = vunpack.c.l.b16 %v756
    %v1242 = vunpack.c.h.b16 %v756
    %v1243 = vunpack.c.l.b16 %v757
    %v1244 = vunpack.c.h.b16 %v757
    %v1245 = vunpack.c.l.b16 %v758
    %v1246 = vunpack.c.h.b16 %v758
    %v1247 = vunpack.c.l.b16 %v759
    %v1248 = vunpack.c.h.b16 %v759
    %v1249 = vunpack.c.l.b16 %v760
    %v1250 = vunpack.c.h.b16 %v760
    %v1251 = vunpack.c.l.b16 %v761
    %v1252 = vunpack.c.h.b16 %v761
    %v1253 = vunpack.c.l.b16 %v762
    %v1254 = vunpack.c.h.b16 %v762
    %v1255 = vunpack.c.l.b16 %v763
    %v1256 = vunpack.c.h.b16 %v763
    %v1257 = vunpack.c.l.b16 %v764
    %v1258 = vunpack.c.h.b16 %v764
    %v1259 = vunpack.c.l.b16 %v765
    %v1260 = vunpack.c.h.b16 %v765
    %v1261 = vunpack.c.l.b16 %v766
    %v1262 = vunpack.c.h.b16 %v766
    %v1263 = vunpack.c.l.b16 %v767
    %v1264 = vunpack.c.h.b16 %v767
    %v1265 = vunpack.c.l.b16 %v768
    %v1266 = vunpack.c.h.b16 %v768
    %v1267 = vunpack.c.l.b16 %v769
    %v1268 = vunpack.c.h.b16 %v769
    %v1269 = vunpack.c.l.b16 %v770
    %v1270 = vunpack.c.h.b16 %v770
    %v1271 = vunpack.c.l.b16 %v771
    %v1272 = vunpack.c.h.b16 %v771
    %v1273 = vunpack.c.l.b16 %v772
    %v1274 = vunpack.c.h.b16 %v772
    %v1275 = vunpack.c.l.b16 %v773
    %v1276 = vunpack.c.h.b16 %v773
    %v1277 = vunpack.c.l.b16 %v774
    %v1278 = vunpack.c.h.b16 %v774
    %v1279 = vunpack.c.l.b16 %v775
    %v1280 = vunpack.c.h.b16 %v775
    %v1281 = vunpack.c.l.b16 %v776
    %v1282 = vunpack.c.h.b16 %v776
    %v1283 = vunpack.c.l.b16 %v777
    %v1284 = vunpack.c.h.b16 %v777
    %v1285 = vunpack.c.l.b16 %v778
    %v1286 = vunpack.c.h.b16 %v778
    %v1287 = vunpack.c.l.b16 %v779
    %v1288 = vunpack.c.h.b16 %v779
    %v1289 = vunpack.c.l.b16 %v780
    %v1290 = vunpack.c.h.b16 %v780
    %v1291 = vunpack.c.l.b16 %v781
    %v1292 = vunpack.c.h.b16 %v781
    %v1293 = vunpack.c.l.b16 %v782
    %v1294 = vunpack.c.h.b16 %v782
    %v1295 = vunpack.c.l.b16 %v783
    %v1296 = vunpack.c.h.b16 %v783
    %v1297 = vunpack.c.l.b16 %v784
    %v1298 = vunpack.c.h.b16 %v784
    %v1299 = vunpack.c.l.b16 %v785
    %v1300 = vunpack.c.h.b16 %v785
    %v1301 = vunpack.c.l.b16 %v786
    %v1302 = vunpack.c.h.b16 %v786
    %v1303 = vunpack.c.l.b16 %v787
    %v1304 = vunpack.c.h.b16 %v787
    %v1305 = vunpack.c.l.b16 %v788
    %v1306 = vunpack.c.h.b16 %v788
    %v1307 = vunpack.c.l.b16 %v789
    %v1308 = vunpack.c.h.b16 %v789
    %v1309 = vunpack.c.l.b16 %v790
    %v1310 = vunpack.c.h.b16 %v790
    %v1311 = vunpack.c.l.b16 %v791
    %v1312 = vunpack.c.h.b16 %v791
    %v1313 = vunpack.c.l.b16 %v792
    %v1314 = vunpack.c.h.b16 %v792
    %v1315 = vunpack.c.l.b16 %v793
    %v1316 = vunpack.c.h.b16 %v793
    %v1317 = vunpack.c.l.b16 %v794
    %v1318 = vunpack.c.h.b16 %v794
    %v1319 = vunpack.c.l.b16 %v795
    %v1320 = vunpack.c.h.b16 %v795
    %v1321 = vunpack.c.l.b16 %v796
    %v1322 = vunpack.c.h.b16 %v796
    %v1323 = vunpack.c.l.b16 %v797
    %v1324 = vunpack.c.h.b16 %v797
    %v1325 = vunpack.c.l.b16 %v798
    %v1326 = vunpack.c.h.b16 %v798
    %v1327 = vunpack.c.l.b16 %v799
    %v1328 = vunpack.c.h.b16 %v799
    %v1329 = vunpack.c.l.b16 %v800
    %v1330 = vunpack.c.h.b16 %v800
    %v1331 = vunpack.c.l.b16 %v801
    %v1332 = vunpack.c.h.b16 %v801
    %v1333 = vunpack.c.l.b16 %v802
    %v1334 = vunpack.c.h.b16 %v802
    %v1335 = vunpack.c.l.b16 %v803
    %v1336 = vunpack.c.h.b16 %v803
    %v1337 = vunpack.c.l.b16 %v804
    %v1338 = vunpack.c.h.b16 %v804
    %v1339 = vunpack.c.l.b16 %v805
    %v1340 = vunpack.c.h.b16 %v805
    %v1341 = vunpack.c.l.b16 %v806
    %v1342 = vunpack.c.h.b16 %v806
    %v1343 = vunpack.c.l.b16 %v807
    %v1344 = vunpack.c.h.b16 %v807
    %v1345 = vunpack.c.l.b16 %v808
    %v1346 = vunpack.c.h.b16 %v808
    %v1347 = vunpack.c.l.b16 %v809
    %v1348 = vunpack.c.h.b16 %v809
    %v1349 = vunpack.c.l.b16 %v810
    %v1350 = vunpack.c.h.b16 %v810
    %v1351 = vunpack.c.l.b16 %v811
    %v1352 = vunpack.c.h.b16 %v811
    %v1353 = vunpack.c.l.b16 %v812
    %v1354 = vunpack.c.h.b16 %v812
    %v1355 = vunpack.c.l.b16 %v813
    %v1356 = vunpack.c.h.b16 %v813
    %v1357 = vunpack.c.l.b16 %v814
    %v1358 = vunpack.c.h.b16 %v814
    %v1359 = vunpack.c.l.b16 %v815
    %v1360 = vunpack.c.h.b16 %v815
    %v1361 = vunpack.c.l.b16 %v816
    %v1362 = vunpack.c.h.b16 %v816
    %v1363 = vunpack.c.l.b16 %v817
    %v1364 = vunpack.c.h.b16 %v817
    %v1365 = vunpack.c.l.b16 %v818
    %v1366 = vunpack.c.h.b16 %v818
    %v1367 = vunpack.c.l.b16 %v819
    %v1368 = vunpack.c.h.b16 %v819
    %v1369 = vunpack.c.l.b16 %v820
    %v1370 = vunpack.c.h.b16 %v820
    %v1371 = vunpack.c.l.b16 %v821
    %v1372 = vunpack.c.h.b16 %v821
    %v1373 = vunpack.c.l.b16 %v822
    %v1374 = vunpack.c.h.b16 %v822
    %v1375 = vunpack.c.l.b16 %v823
    %v1376 = vunpack.c.h.b16 %v823
    %v1377 = vunpack.c.l.b16 %v824
    %v1378 = vunpack.c.h.b16 %v824
    %v1379 = vunpack.c.l.b16 %v825
    %v1380 = vunpack.c.h.b16 %v825
    %v1381 = vunpack.c.l.b16 %v826
    %v1382 = vunpack.c.h.b16 %v826
    %v1383 = vunpack.c.l.b16 %v827
    %v1384 = vunpack.c.h.b16 %v827
    %v1385 = vunpack.c.l.b16 %v828
    %v1386 = vunpack.c.h.b16 %v828
    %v1387 = vunpack.c.l.b16 %v829
    %v1388 = vunpack.c.h.b16 %v829
    %v1389 = vunpack.c.l.b16 %v830
    %v1390 = vunpack.c.h.b16 %v830
    %v1391 = vunpack.c.l.b16 %v831
    %v1392 = vunpack.c.h.b16 %v831
    %v1393 = vunpack.c.l.b16 %v832
    %v1394 = vunpack.c.h.b16 %v832
    %v1395 = vunpack.c.l.b16 %v833
    %v1396 = vunpack.c.h.b16 %v833
    %v1397 = vunpack.c.l.b16 %v834
    %v1398 = vunpack.c.h.b16 %v834
    %v1399 = vunpack.c.l.b16 %v835
    %v1400 = vunpack.c.h.b16 %v835
    %v1401 = vunpack.c.l.b16 %v836
    %v1402 = vunpack.c.h.b16 %v836
    %v1403 = vunpack.c.l.b16 %v837
    %v1404 = vunpack.c.h.b16 %v837
    %v1405 = vunpack.c.l.b16 %v838
    %v1406 = vunpack.c.h.b16 %v838
    %v1407 = vunpack.c.l.b16 %v839
    %v1408 = vunpack.c.h.b16 %v839
    %v1409 = vunpack.c.l.b16 %v840
    %v1410 = vunpack.c.h.b16 %v840
    %v1411 = vunpack.c.l.b16 %v841
    %v1412 = vunpack.c.h.b16 %v841
    %v1413 = vunpack.c.l.b16 %v842
    %v1414 = vunpack.c.h.b16 %v842
    %v1415 = vunpack.c.l.b16 %v843
    %v1416 = vunpack.c.h.b16 %v843
    %v1417 = vunpack.c.l.b16 %v844
    %v1418 = vunpack.c.h.b16 %v844
    %v1419 = vunpack.c.l.b16 %v845
    %v1420 = vunpack.c.h.b16 %v845
    %v1421 = vunpack.c.l.b16 %v846
    %v1422 = vunpack.c.h.b16 %v846
    %v1423 = vunpack.c.l.b16 %v847
    %v1424 = vunpack.c.h.b16 %v847
    %v1425 = vunpack.c.l.b16 %v848
    %v1426 = vunpack.c.h.b16 %v848
    %v1427 = vunpack.c.l.b16 %v849
    %v1428 = vunpack.c.h.b16 %v849
    %v1429 = vunpack.c.l.b16 %v850
    %v1430 = vunpack.c.h.b16 %v850
    %v1431 = vunpack.c.l.b16 %v851
    %v1432 = vunpack.c.h.b16 %v851
    %v1433 = vunpack.c.l.b16 %v852
    %v1434 = vunpack.c.h.b16 %v852
    %v1435 = vunpack.c.l.b16 %v853
    %v1436 = vunpack.c.h.b16 %v853
    %v1437 = vunpack.c.l.b16 %v854
    %v1438 = vunpack.c.h.b16 %v854
    %v1439 = vunpack.c.l.b16 %v855
    %v1440 = vunpack.c.h.b16 %v855
    %v1441 = vunpack.c.l.b16 %v856
    %v1442 = vunpack.c.h.b16 %v856
    %v1443 = vunpack.c.l.b16 %v857
    %v1444 = vunpack.c.h.b16 %v857
    %v1445 = vunpack.c.l.b16 %v858
    %v1446 = vunpack.c.h.b16 %v858
    %v1447 = vunpack.c.l.b16 %v859
    %v1448 = vunpack.c.h.b16 %v859
    %v1449 = vunpack.c.l.b16 %v860
    %v1450 = vunpack.c.h.b16 %v860
    %v1451 = vunpack.c.l.b16 %v861
    %v1452 = vunpack.c.h.b16 %v861
    %v1453 = vunpack.c.l.b16 %v862
    %v1454 = vunpack.c.h.b16 %v862
    %v1455 = vunpack.c.l.b16 %v863
    %v1456 = vunpack.c.h.b16 %v863
    %v1457 = vunpack.c.l.b16 %v864
    %v1458 = vunpack.c.h.b16 %v864
    %v1459 = vunpack.c.l.b16 %v865
    %v1460 = vunpack.c.h.b16 %v865
    %v1461 = vunpack.c.l.b16 %v866
    %v1462 = vunpack.c.h.b16 %v866
    %v1463 = vunpack.c.l.b16 %v867
    %v1464 = vunpack.c.h.b16 %v867
    %v1465 = vunpack.c.l.b16 %v868
    %v1466 = vunpack.c.h.b16 %v868
    %v1467 = vunpack.c.l.b16 %v869
    %v1468 = vunpack.c.h.b16 %v869
    %v1469 = vunpack.c.l.b16 %v870
    %v1470 = vunpack.c.h.b16 %v870
    %v1471 = vunpack.c.l.b16 %v871
    %v1472 = vunpack.c.h.b16 %v871
    %v1473 = vunpack.c.l.b16 %v872
    %v1474 = vunpack.c.h.b16 %v872
    %v1475 = vunpack.c.l.b16 %v873
    %v1476 = vunpack.c.h.b16 %v873
    %v1477 = vunpack.c.l.b16 %v874
    %v1478 = vunpack.c.h.b16 %v874
    %v1479 = vunpack.c.l.b16 %v875
    %v1480 = vunpack.c.h.b16 %v875
    %v1481 = vunpack.c.l.b16 %v876
    %v1482 = vunpack.c.h.b16 %v876
    %v1483 = vunpack.c.l.b16 %v877
    %v1484 = vunpack.c.h.b16 %v877
    %v1485 = vunpack.c.l.b16 %v878
    %v1486 = vunpack.c.h.b16 %v878
    %v1487 = vpack.c.b16 %v1109, %v1103
    %v1488 = vpack.c.b16 %v1110, %v1104
    %v1489 = vpack.c.b16 %v1111, %v1105
    %v1490 = vpack.c.b16 %v1112, %v1106
    %v1491 = vpack.c.b16 %v1113, %v1107
    %v1492 = vpack.c.b16 %v1114, %v1108
    %v1493 = vpack.c.b16 %v1121, %v1115
    %v1494 = vpack.c.b16 %v1122, %v1116
    %v1495 = vpack.c.b16 %v1123, %v1117
    %v1496 = vpack.c.b16 %v1124, %v1118
    %v1497 = vpack.c.b16 %v1125, %v1119
    %v1498 = vpack.c.b16 %v1126, %v1120
    %v1499 = vpack.c.b16 %v1133, %v1127
    %v1500 = vpack.c.b16 %v1134, %v1128
    %v1501 = vpack.c.b16 %v1135, %v1129
    %v1502 = vpack.c.b16 %v1136, %v1130
    %v1503 = vpack.c.b16 %v1137, %v1131
    %v1504 = vpack.c.b16 %v1138, %v1132
    %v1505 = vpack.c.b16 %v1145, %v1139
    %v1506 = vpack.c.b16 %v1146, %v1140
    %v1507 = vpack.c.b16 %v1147, %v1141
    %v1508 = vpack.c.b16 %v1148, %v1142
    %v1509 = vpack.c.b16 %v1149, %v1143
    %v1510 = vpack.c.b16 %v1150, %v1144
    %v1511 = vpack.c.b16 %v1157, %v1151
    %v1512 = vpack.c.b16 %v1158, %v1152
    %v1513 = vpack.c.b16 %v1159, %v1153
    %v1514 = vpack.c.b16 %v1160, %v1154
    %v1515 = vpack.c.b16 %v1161, %v1155
    %v1516 = vpack.c.b16 %v1162, %v1156
    %v1517 = vpack.c.b16 %v1169, %v1163
    %v1518 = vpack.c.b16 %v1170, %v1164
    %v1519 = vpack.c.b16 %v1171, %v1165
    %v1520 = vpack.c.b16 %v1172, %v1166
    %v1521 = vpack.c.b16 %v1173, %v1167
    %v1522 = vpack.c.b16 %v1174, %v1168
    %v1523 = vpack.c.b16 %v1181, %v1175
    %v1524 = vpack.c.b16 %v1182, %v1176
    %v1525 = vpack.c.b16 %v1183, %v1177
    %v1526 = vpack.c.b16 %v1184, %v1178
    %v1527 = vpack.c.b16 %v1185, %v1179
    %v1528 = vpack.c.b16 %v1186, %v1180
    %v1529 = vpack.c.b16 %v1193, %v1187
    %v1530 = vpack.c.b16 %v1194, %v1188
    %v1531 = vpack.c.b16 %v1195, %v1189
    %v1532 = vpack.c.b16 %v1196, %v1190
    %v1533 = vpack.c.b16 %v1197, %v1191
    %v1534 = vpack.c.b16 %v1198, %v1192
    %v1535 = vpack.c.b16 %v1205, %v1199
    %v1536 = vpack.c.b16 %v1206, %v1200
    %v1537 = vpack.c.b16 %v1207, %v1201
    %v1538 = vpack.c.b16 %v1208, %v1202
    %v1539 = vpack.c.b16 %v1209, %v1203
    %v1540 = vpack.c.b16 %v1210, %v1204
    %v1541 = vpack.c.b16 %v1217, %v1211
    %v1542 = vpack.c.b16 %v1218, %v1212
    %v1543 = vpack.c.b16 %v1219, %v1213
    %v1544 = vpack.c.b16 %v1220, %v1214
    %v1545 = vpack.c.b16 %v1221, %v1215
    %v1546 = vpack.c.b16 %v1222, %v1216
    %v1547 = vpack.c.b16 %v1229, %v1223
    %v1548 = vpack.c.b16 %v1230, %v1224
    %v1549 = vpack.c.b16 %v1231, %v1225
    %v1550 = vpack.c.b16 %v1232, %v1226
    %v1551 = vpack.c.b16 %v1233, %v1227
    %v1552 = vpack.c.b16 %v1234, %v1228
    %v1553 = vpack.c.b16 %v1241, %v1235
    %v1554 = vpack.c.b16 %v1242, %v1236
    %v1555 = vpack.c.b16 %v1243, %v1237
    %v1556 = vpack.c.b16 %v1244, %v1238
    %v1557 = vpack.c.b16 %v1245, %v1239
    %v1558 = vpack.c.b16 %v1246, %v1240
    %v1559 = vpack.c.b16 %v1253, %v1247
    %v1560 = vpack.c.b16 %v1254, %v1248
    %v1561 = vpack.c.b16 %v1255, %v1249
    %v1562 = vpack.c.b16 %v1256, %v1250
    %v1563 = vpack.c.b16 %v1257, %v1251
    %v1564 = vpack.c.b16 %v1258, %v1252
    %v1565 = vpack.c.b16 %v1265, %v1259
    %v1566 = vpack.c.b16 %v1266, %v1260
    %v1567 = vpack.c.b16 %v1267, %v1261
    %v1568 = vpack.c.b16 %v1268, %v1262
    %v1569 = vpack.c.b16 %v1269, %v1263
    %v1570 = vpack.c.b16 %v1270, %v1264
    %v1571 = vpack.c.b16 %v1277, %v1271
    %v1572 = vpack.c.b16 %v1278, %v1272
    %v1573 = vpack.c.b16 %v1279, %v1273
    %v1574 = vpack.c.b16 %v1280, %v1274
    %v1575 = vpack.c.b16 %v1281, %v1275
    %v1576 = vpack.c.b16 %v1282, %v1276
    %v1577 = vpack.c.b16 %v1289, %v1283
    %v1578 = vpack.c.b16 %v1290, %v1284
    %v1579 = vpack.c.b16 %v1291, %v1285
    %v1580 = vpack.c.b16 %v1292, %v1286
    %v1581 = vpack.c.b16 %v1293, %v1287
    %v1582 = vpack.c.b16 %v1294, %v1288
    %v1583 = vpack.c.b16 %v1301, %v1295
    %v1584 = vpack.c.b16 %v1302, %v1296
    %v1585 = vpack.c.b16 %v1303, %v1297
    %v1586 = vpack.c.b16 %v1304, %v1298
    %v1587 = vpack.c.b16 %v1305, %v1299
    %v1588 = vpack.c.b16 %v1306, %v1300
    %v1589 = vpack.c.b16 %v1313, %v1307
    %v1590 = vpack.c.b16 %v1314, %v1308
    %v1591 = vpack.c.b16 %v1315, %v1309
    %v1592 = vpack.c.b16 %v1316, %v1310
    %v1593 = vpack.c.b16 %v1317, %v1311
    %v1594 = vpack.c.b16 %v1318, %v1312
    %v1595 = vpack.c.b16 %v1325, %v1319
    %v1596 = vpack.c.b16 %v1326, %v1320
    %v1597 = vpack.c.b16 %v1327, %v1321
    %v1598 = vpack.c.b16 %v1328, %v1322
    %v1599 = vpack.c.b16 %v1329, %v1323
    %v1600 = vpack.c.b16 %v1330, %v1324
    %v1601 = vpack.c.b16 %v1337, %v1331
    %v1602 = vpack.c.b16 %v1338, %v1332
    %v1603 = vpack.c.b16 %v1339, %v1333
    %v1604 = vpack.c.b16 %v1340, %v1334
    %v1605 = vpack.c.b16 %v1341, %v1335
    %v1606 = vpack.c.b16 %v1342, %v1336
    %v1607 = vpack.c.b16 %v1349, %v1343
    %v1608 = vpack.c.b16 %v1350, %v1344
    %v1609 = vpack.c.b16 %v1351, %v1345
    %v1610 = vpack.c.b16 %v1352, %v1346
    %v1611 = vpack.c.b16 %v1353, %v1347
    %v1612 = vpack.c.b16 %v1354, %v1348
    %v1613 = vpack.c.b16 %v1361, %v1355
    %v1614 = vpack.c.b16 %v1362, %v1356
    %v1615 = vpack.c.b16 %v1363, %v1357
    %v1616 = vpack.c.b16 %v1364, %v1358
    %v1617 = vpack.c.b16 %v1365, %v1359
    %v1618 = vpack.c.b16 %v1366, %v1360
    %v1619 = vpack.c.b16 %v1373, %v1367
    %v1620 = vpack.c.b16 %v1374, %v1368
    %v1621 = vpack.c.b16 %v1375, %v1369
    %v1622 = vpack.c.b16 %v1376, %v1370
    %v1623 = vpack.c.b16 %v1377, %v1371
    %v1624 = vpack.c.b16 %v1378, %v1372
    %v1625 = vpack.c.b16 %v1385, %v1379
    %v1626 = vpack.c.b16 %v1386, %v1380
    %v1627 = vpack.c.b16 %v1387, %v1381
    %v1628 = vpack.c.b16 %v1388, %v1382
    %v1629 = vpack.c.b16 %v1389, %v1383
    %v1630 = vpack.c.b16 %v1390, %v1384
    %v1631 = vpack.c.b16 %v1397, %v1391
    %v1632 = vpack.c.b16 %v1398, %v1392
    %v1633 = vpack.c.b16 %v1399, %v1393
    %v1634 = vpack.c.b16 %v1400, %v1394
    %v1635 = vpack.c.b16 %v1401, %v1395
    %v1636 = vpack.c.b16 %v1402, %v1396
    %v1637 = vpack.c.b16 %v1409, %v1403
    %v1638 = vpack.c.b16 %v1410, %v1404
    %v1639 = vpack.c.b16 %v1411, %v1405
    %v1640 = vpack.c.b16 %v1412, %v1406
    %v1641 = vpack.c.b16 %v1413, %v1407
    %v1642 = vpack.c.b16 %v1414, %v1408
    %v1643 = vpack.c.b16 %v1421, %v1415
    %v1644 = vpack.c.b16 %v1422, %v1416
    %v1645 = vpack.c.b16 %v1423, %v1417
    %v1646 = vpack.c.b16 %v1424, %v1418
    %v1647 = vpack.c.b16 %v1425, %v1419
    %v1648 = vpack.c.b16 %v1426, %v1420
    %v1649 = vpack.c.b16 %v1433, %v1427
    %v1650 = vpack.c.b16 %v1434, %v1428
    %v1651 = vpack.c.b16 %v1435, %v1429
    %v1652 = vpack.c.b16 %v1436, %v1430
    %v1653 = vpack.c.b16 %v1437, %v1431
    %v1654 = vpack.c.b16 %v1438, %v1432
    %v1655 = vpack.c.b16 %v1445, %v1439
    %v1656 = vpack.c.b16 %v1446, %v1440
    %v1657 = vpack.c.b16 %v1447, %v1441
    %v1658 = vpack.c.b16 %v1448, %v1442
    %v1659 = vpack.c.b16 %v1449, %v1443
    %v1660 = vpack.c.b16 %v1450, %v1444
    %v1661 = vpack.c.b16 %v1457, %v1451
    %v1662 = vpack.c.b16 %v1458, %v1452
    %v1663 = vpack.c.b16 %v1459, %v1453
    %v1664 = vpack.c.b16 %v1460, %v1454
    %v1665 = vpack.c.b16 %v1461, %v1455
    %v1666 = vpack.c.b16 %v1462, %v1456
    %v1667 = vpack.c.b16 %v1469, %v1463
    %v1668 = vpack.c.b16 %v1470, %v1464
    %v1669 = vpack.c.b16 %v1471, %v1465
    %v1670 = vpack.c.b16 %v1472, %v1466
    %v1671 = vpack.c.b16 %v1473, %v1467
    %v1672 = vpack.c.b16 %v1474, %v1468
    %v1673 = vpack.c.b16 %v1481, %v1475
    %v1674 = vpack.c.b16 %v1482, %v1476
    %v1675 = vpack.c.b16 %v1483, %v1477
    %v1676 = vpack.c.b16 %v1484, %v1478
    %v1677 = vpack.c.b16 %v1485, %v1479
    %v1678 = vpack.c.b16 %v1486, %v1480
    %1871 = vmatprep.subr.bf16.mxu0 %v1488
    %1872 = vmatpush1.bf16.msra.mxu0 %v1487
    %1873 = vmatprep.subr.bf16.mxu0 %v1494
    %1874 = vmatpush1.bf16.msra.mxu0 %v1493
    %1875 = vmatprep.subr.bf16.mxu0 %v1500
    %1876 = vmatpush1.bf16.msra.mxu0 %v1499
    %1877 = vmatprep.subr.bf16.mxu0 %v1506
    %1878 = vmatpush1.bf16.msra.mxu0 %v1505
    %1879 = vmatprep.subr.bf16.mxu0 %v1512
    %1880 = vmatpush1.bf16.msra.mxu0 %v1511
    %1881 = vmatprep.subr.bf16.mxu0 %v1518
    %1882 = vmatpush1.bf16.msra.mxu0 %v1517
    %1883 = vmatprep.subr.bf16.mxu0 %v1524
    %1884 = vmatpush1.bf16.msra.mxu0 %v1523
    %1885 = vmatprep.subr.bf16.mxu0 %v1530
    %1886 = vmatpush1.bf16.msra.mxu0 %v1529
    %1887 = vmatprep.subr.bf16.mxu0 %v1536
    %1888 = vmatpush1.bf16.msra.mxu0 %v1535
    %1889 = vmatprep.subr.bf16.mxu0 %v1542
    %1890 = vmatpush1.bf16.msra.mxu0 %v1541
    %1891 = vmatprep.subr.bf16.mxu0 %v1548
    %1892 = vmatpush1.bf16.msra.mxu0 %v1547
    %1893 = vmatprep.subr.bf16.mxu0 %v1554
    %1894 = vmatpush1.bf16.msra.mxu0 %v1553
    %1895 = vmatprep.subr.bf16.mxu0 %v1560
    %1896 = vmatpush1.bf16.msra.mxu0 %v1559
    %1897 = vmatprep.subr.bf16.mxu0 %v1566
    %1898 = vmatpush1.bf16.msra.mxu0 %v1565
    %1899 = vmatprep.subr.bf16.mxu0 %v1572
    %1900 = vmatpush1.bf16.msra.mxu0 %v1571
    %1901 = vmatprep.subr.bf16.mxu0 %v1578
    %1902 = vmatpush1.bf16.msra.mxu0 %v1577
    %1903 = vmatprep.mubr.bf16.mxu0 %v684
    %1904 = vmatmul.mubr.bf16.gmra.mrb[0].mxu0 %v683
    %v1905 = vpop.f32.mrb[0].mxu0
    %v1906 = vadd.f32 %v884, %v1905
    %v1907 = vpop.f32.mrb[0].mxu0
    %v1908 = vadd.f32 %v888, %v1907
    %v1909 = vpop.f32.mrb[0].mxu0
    %v1910 = vpop.f32.mrb[0].mxu0
    %1911 = vdwg.mxu0
    %1912 = vmatprep.subr.bf16.mxu0 %v1584
    %1913 = vmatpush1.bf16.msra.mxu0 %v1583
    %1914 = vmatprep.subr.bf16.mxu0 %v1590
    %1915 = vmatpush1.bf16.msra.mxu0 %v1589
    %1916 = vmatprep.subr.bf16.mxu0 %v1596
    %1917 = vmatpush1.bf16.msra.mxu0 %v1595
    %1918 = vmatprep.subr.bf16.mxu0 %v1602
    %1919 = vmatpush1.bf16.msra.mxu0 %v1601
    %1920 = vmatprep.subr.bf16.mxu0 %v1608
    %1921 = vmatpush1.bf16.msra.mxu0 %v1607
    %1922 = vmatprep.subr.bf16.mxu0 %v1614
    %1923 = vmatpush1.bf16.msra.mxu0 %v1613
    %1924 = vmatprep.subr.bf16.mxu0 %v1620
    %1925 = vmatpush1.bf16.msra.mxu0 %v1619
    %1926 = vmatprep.subr.bf16.mxu0 %v1626
    %1927 = vmatpush1.bf16.msra.mxu0 %v1625
    %1928 = vmatprep.subr.bf16.mxu0 %v1632
    %1929 = vmatpush1.bf16.msra.mxu0 %v1631
    %1930 = vmatprep.subr.bf16.mxu0 %v1638
    %1931 = vmatpush1.bf16.msra.mxu0 %v1637
    %1932 = vmatprep.subr.bf16.mxu0 %v1644
    %1933 = vmatpush1.bf16.msra.mxu0 %v1643
    %1934 = vmatprep.subr.bf16.mxu0 %v1650
    %1935 = vmatpush1.bf16.msra.mxu0 %v1649
    %1936 = vmatprep.subr.bf16.mxu0 %v1656
    %1937 = vmatpush1.bf16.msra.mxu0 %v1655
    %1938 = vmatprep.subr.bf16.mxu0 %v1662
    %1939 = vmatpush1.bf16.msra.mxu0 %v1661
    %1940 = vmatprep.subr.bf16.mxu0 %v1668
    %1941 = vmatpush1.bf16.msra.mxu0 %v1667
    %1942 = vmatprep.subr.bf16.mxu0 %v1674
    %1943 = vmatpush1.bf16.msra.mxu0 %v1673
    %1944 = vmatprep.mubr.bf16.mxu0 %v686
    %1945 = vmatmul.mubr.bf16.gmra.mrb[0].mxu0 %v685
    %v1946 = vpop.f32.mrb[0].mxu0
    %v1947 = vadd.f32 %v1906, %v1946
    %v1948 = vpop.f32.mrb[0].mxu0
    %v1949 = vadd.f32 %v1908, %v1948
    %v1950 = vpop.f32.mrb[0].mxu0
    %v1951 = vpop.f32.mrb[0].mxu0
    %1952 = vdwg.mxu0
    %1953 = vmatprep.subr.bf16.mxu0 %v1490
    %1954 = vmatpush1.bf16.msra.mxu0 %v1489
    %1955 = vmatprep.subr.bf16.mxu0 %v1496
    %1956 = vmatpush1.bf16.msra.mxu0 %v1495
    %1957 = vmatprep.subr.bf16.mxu0 %v1502
    %1958 = vmatpush1.bf16.msra.mxu0 %v1501
    %1959 = vmatprep.subr.bf16.mxu0 %v1508
    %1960 = vmatpush1.bf16.msra.mxu0 %v1507
    %1961 = vmatprep.subr.bf16.mxu0 %v1514
    %1962 = vmatpush1.bf16.msra.mxu0 %v1513
    %1963 = vmatprep.subr.bf16.mxu0 %v1520
    %1964 = vmatpush1.bf16.msra.mxu0 %v1519
    %1965 = vmatprep.subr.bf16.mxu0 %v1526
    %1966 = vmatpush1.bf16.msra.mxu0 %v1525
    %1967 = vmatprep.subr.bf16.mxu0 %v1532
    %1968 = vmatpush1.bf16.msra.mxu0 %v1531
    %1969 = vmatprep.subr.bf16.mxu0 %v1538
    %1970 = vmatpush1.bf16.msra.mxu0 %v1537
    %1971 = vmatprep.subr.bf16.mxu0 %v1544
    %1972 = vmatpush1.bf16.msra.mxu0 %v1543
    %1973 = vmatprep.subr.bf16.mxu0 %v1550
    %1974 = vmatpush1.bf16.msra.mxu0 %v1549
    %1975 = vmatprep.subr.bf16.mxu0 %v1556
    %1976 = vmatpush1.bf16.msra.mxu0 %v1555
    %1977 = vmatprep.subr.bf16.mxu0 %v1562
    %1978 = vmatpush1.bf16.msra.mxu0 %v1561
    %1979 = vmatprep.subr.bf16.mxu0 %v1568
    %1980 = vmatpush1.bf16.msra.mxu0 %v1567
    %1981 = vmatprep.subr.bf16.mxu0 %v1574
    %1982 = vmatpush1.bf16.msra.mxu0 %v1573
    %1983 = vmatprep.subr.bf16.mxu0 %v1580
    %1984 = vmatpush1.bf16.msra.mxu0 %v1579
    %1985 = vmatprep.mubr.bf16.mxu0 %v684
    %1986 = vmatmul.mubr.bf16.gmra.mrb[0].mxu0 %v683
    %v1987 = vpop.f32.mrb[0].mxu0
    %v1988 = vadd.f32 %v892, %v1987
    %v1989 = vpop.f32.mrb[0].mxu0
    %v1990 = vadd.f32 %v896, %v1989
    %v1991 = vpop.f32.mrb[0].mxu0
    %v1992 = vpop.f32.mrb[0].mxu0
    %1993 = vdwg.mxu0
    %1994 = vmatprep.subr.bf16.mxu0 %v1586
    %1995 = vmatpush1.bf16.msra.mxu0 %v1585
    %1996 = vmatprep.subr.bf16.mxu0 %v1592
    %1997 = vmatpush1.bf16.msra.mxu0 %v1591
    %1998 = vmatprep.subr.bf16.mxu0 %v1598
    %1999 = vmatpush1.bf16.msra.mxu0 %v1597
    %2000 = vmatprep.subr.bf16.mxu0 %v1604
    %2001 = vmatpush1.bf16.msra.mxu0 %v1603
    %2002 = vmatprep.subr.bf16.mxu0 %v1610
    %2003 = vmatpush1.bf16.msra.mxu0 %v1609
    %2004 = vmatprep.subr.bf16.mxu0 %v1616
    %2005 = vmatpush1.bf16.msra.mxu0 %v1615
    %2006 = vmatprep.subr.bf16.mxu0 %v1622
    %2007 = vmatpush1.bf16.msra.mxu0 %v1621
    %2008 = vmatprep.subr.bf16.mxu0 %v1628
    %2009 = vmatpush1.bf16.msra.mxu0 %v1627
    %2010 = vmatprep.subr.bf16.mxu0 %v1634
    %2011 = vmatpush1.bf16.msra.mxu0 %v1633
    %2012 = vmatprep.subr.bf16.mxu0 %v1640
    %2013 = vmatpush1.bf16.msra.mxu0 %v1639
    %2014 = vmatprep.subr.bf16.mxu0 %v1646
    %2015 = vmatpush1.bf16.msra.mxu0 %v1645
    %2016 = vmatprep.subr.bf16.mxu0 %v1652
    %2017 = vmatpush1.bf16.msra.mxu0 %v1651
    %2018 = vmatprep.subr.bf16.mxu0 %v1658
    %2019 = vmatpush1.bf16.msra.mxu0 %v1657
    %2020 = vmatprep.subr.bf16.mxu0 %v1664
    %2021 = vmatpush1.bf16.msra.mxu0 %v1663
    %2022 = vmatprep.subr.bf16.mxu0 %v1670
    %2023 = vmatpush1.bf16.msra.mxu0 %v1669
    %2024 = vmatprep.subr.bf16.mxu0 %v1676
    %2025 = vmatpush1.bf16.msra.mxu0 %v1675
    %2026 = vmatprep.mubr.bf16.mxu0 %v686
    %2027 = vmatmul.mubr.bf16.gmra.mrb[0].mxu0 %v685
    %v2028 = vpop.f32.mrb[0].mxu0
    %v2029 = vadd.f32 %v1988, %v2028
    %v2030 = vpop.f32.mrb[0].mxu0
    %v2031 = vadd.f32 %v1990, %v2030
    %v2032 = vpop.f32.mrb[0].mxu0
    %v2033 = vpop.f32.mrb[0].mxu0
    %2034 = vdwg.mxu0
    %2035 = vmatprep.subr.bf16.mxu0 %v1492
    %2036 = vmatpush1.bf16.msra.mxu0 %v1491
    %2037 = vmatprep.subr.bf16.mxu0 %v1498
    %2038 = vmatpush1.bf16.msra.mxu0 %v1497
    %2039 = vmatprep.subr.bf16.mxu0 %v1504
    %2040 = vmatpush1.bf16.msra.mxu0 %v1503
    %2041 = vmatprep.subr.bf16.mxu0 %v1510
    %2042 = vmatpush1.bf16.msra.mxu0 %v1509
    %2043 = vmatprep.subr.bf16.mxu0 %v1516
    %2044 = vmatpush1.bf16.msra.mxu0 %v1515
    %2045 = vmatprep.subr.bf16.mxu0 %v1522
    %2046 = vmatpush1.bf16.msra.mxu0 %v1521
    %2047 = vmatprep.subr.bf16.mxu0 %v1528
    %2048 = vmatpush1.bf16.msra.mxu0 %v1527
    %2049 = vmatprep.subr.bf16.mxu0 %v1534
    %2050 = vmatpush1.bf16.msra.mxu0 %v1533
    %2051 = vmatprep.subr.bf16.mxu0 %v1540
    %2052 = vmatpush1.bf16.msra.mxu0 %v1539
    %2053 = vmatprep.subr.bf16.mxu0 %v1546
    %2054 = vmatpush1.bf16.msra.mxu0 %v1545
    %2055 = vmatprep.subr.bf16.mxu0 %v1552
    %2056 = vmatpush1.bf16.msra.mxu0 %v1551
    %2057 = vmatprep.subr.bf16.mxu0 %v1558
    %2058 = vmatpush1.bf16.msra.mxu0 %v1557
    %2059 = vmatprep.subr.bf16.mxu0 %v1564
    %2060 = vmatpush1.bf16.msra.mxu0 %v1563
    %2061 = vmatprep.subr.bf16.mxu0 %v1570
    %2062 = vmatpush1.bf16.msra.mxu0 %v1569
    %2063 = vmatprep.subr.bf16.mxu0 %v1576
    %2064 = vmatpush1.bf16.msra.mxu0 %v1575
    %2065 = vmatprep.subr.bf16.mxu0 %v1582
    %2066 = vmatpush1.bf16.msra.mxu0 %v1581
    %2067 = vmatprep.mubr.bf16.mxu0 %v684
    %2068 = vmatmul.mubr.bf16.gmra.mrb[0].mxu0 %v683
    %v2069 = vpop.f32.mrb[0].mxu0
    %v2070 = vadd.f32 %v900, %v2069
    %v2071 = vpop.f32.mrb[0].mxu0
    %v2072 = vadd.f32 %v904, %v2071
    %v2073 = vpop.f32.mrb[0].mxu0
    %v2074 = vpop.f32.mrb[0].mxu0
    %2075 = vdwg.mxu0
    %2076 = vmatprep.subr.bf16.mxu0 %v1588
    %2077 = vmatpush1.bf16.msra.mxu0 %v1587
    %2078 = vmatprep.subr.bf16.mxu0 %v1594
    %2079 = vmatpush1.bf16.msra.mxu0 %v1593
    %2080 = vmatprep.subr.bf16.mxu0 %v1600
    %2081 = vmatpush1.bf16.msra.mxu0 %v1599
    %2082 = vmatprep.subr.bf16.mxu0 %v1606
    %2083 = vmatpush1.bf16.msra.mxu0 %v1605
    %2084 = vmatprep.subr.bf16.mxu0 %v1612
    %2085 = vmatpush1.bf16.msra.mxu0 %v1611
    %2086 = vmatprep.subr.bf16.mxu0 %v1618
    %2087 = vmatpush1.bf16.msra.mxu0 %v1617
    %2088 = vmatprep.subr.bf16.mxu0 %v1624
    %2089 = vmatpush1.bf16.msra.mxu0 %v1623
    %2090 = vmatprep.subr.bf16.mxu0 %v1630
    %2091 = vmatpush1.bf16.msra.mxu0 %v1629
    %2092 = vmatprep.subr.bf16.mxu0 %v1636
    %2093 = vmatpush1.bf16.msra.mxu0 %v1635
    %2094 = vmatprep.subr.bf16.mxu0 %v1642
    %2095 = vmatpush1.bf16.msra.mxu0 %v1641
    %2096 = vmatprep.subr.bf16.mxu0 %v1648
    %2097 = vmatpush1.bf16.msra.mxu0 %v1647
    %2098 = vmatprep.subr.bf16.mxu0 %v1654
    %2099 = vmatpush1.bf16.msra.mxu0 %v1653
    %2100 = vmatprep.subr.bf16.mxu0 %v1660
    %2101 = vmatpush1.bf16.msra.mxu0 %v1659
    %2102 = vmatprep.subr.bf16.mxu0 %v1666
    %2103 = vmatpush1.bf16.msra.mxu0 %v1665
    %2104 = vmatprep.subr.bf16.mxu0 %v1672
    %2105 = vmatpush1.bf16.msra.mxu0 %v1671
    %2106 = vmatprep.subr.bf16.mxu0 %v1678
    %2107 = vmatpush1.bf16.msra.mxu0 %v1677
    %2108 = vmatprep.mubr.bf16.mxu0 %v686
    %2109 = vmatmul.mubr.bf16.gmra.mrb[0].mxu0 %v685
    %v2110 = vpop.f32.mrb[0].mxu0
    %v2111 = vadd.f32 %v2070, %v2110
    %v2112 = vpop.f32.mrb[0].mxu0
    %v2113 = vadd.f32 %v2072, %v2112
    %v2114 = vpop.f32.mrb[0].mxu0
    %v2115 = vpop.f32.mrb[0].mxu0
    %2116 = vdwg.mxu0
    %v2117 = vsub.f32 0.0, %v1947
    %v2118 = vsub.f32 0.0, %v1949
    %v2119 = vsub.f32 0.0, %v2029
    %v2120 = vsub.f32 0.0, %v2031
    %v2121 = vsub.f32 0.0, %v2111
    %v2122 = vsub.f32 0.0, %v2113
    %v2123 = vmul.f32 %v2117, 1.442695
    %v2124 = vpow.pop %v2123
    %v2125 = vmul.f32 %v2118, 1.442695
    %v2126 = vpow.pop %v2125
    %v2127 = vmul.f32 %v2119, 1.442695
    %v2128 = vpow.pop %v2127
    %v2129 = vmul.f32 %v2120, 1.442695
    %v2130 = vpow.pop %v2129
    %v2131 = vmul.f32 %v2121, 1.442695
    %v2132 = vpow.pop %v2131
    %v2133 = vmul.f32 %v2122, 1.442695
    %v2134 = vpow.pop %v2133
    %v2135 = vadd.f32 %v2124, 1.0
    %v2136 = vadd.f32 %v2126, 1.0
    %v2137 = vadd.f32 %v2128, 1.0
    %v2138 = vadd.f32 %v2130, 1.0
    %v2139 = vadd.f32 %v2132, 1.0
    %v2140 = vadd.f32 %v2134, 1.0
    %v2141 = vrcp.pop %v2135
    %v2142 = vrcp.pop %v2136
    %v2143 = vrcp.pop %v2137
    %v2144 = vrcp.pop %v2138
    %v2145 = vrcp.pop %v2139
    %v2146 = vrcp.pop %v2140
    %v2147 = vpack.c.bf16 %v2141, %v2141
    %v2148 = vpack.c.bf16 %v2142, %v2142
    %v2149 = vpack.c.bf16 %v2143, %v2143
    %v2150 = vpack.c.bf16 %v2144, %v2144
    %v2151 = vpack.c.bf16 %v2145, %v2145
    %v2152 = vpack.c.bf16 %v2146, %v2146
    %v2159 = vunpack.c.l.b16 %v2147
    %v2160 = vunpack.c.l.b16 %v2148
    %v2161 = vunpack.c.l.b16 %v2149
    %v2162 = vunpack.c.l.b16 %v2150
    %v2163 = vunpack.c.l.b16 %v2151
    %v2164 = vunpack.c.l.b16 %v2152
    %v2165 = vpack.c.b16 %v2160, %v2159
    %v2166 = vpack.c.b16 %v2162, %v2161
    %v2167 = vpack.c.b16 %v2164, %v2163
    %2171 = vst [vmem:[#allocation11] sm:$0xff] %v2165
    %2172 = vst [vmem:[#allocation11 + $0x8] sm:$0xff] %v2166
    %2173 = vst [vmem:[#allocation11 + $0x10] sm:$0xff] %v2167
    // Predicated region
    $region50: #{tpu_custom_call.1} parent=1 // pred_check
      _
    $region51: #{tpu_custom_call.1} parent=1 // pred_check_branch
      %2175 = sbr.rel (0) target = $region53
    $region52: #{tpu_custom_call.1} parent=1 // pred_region
      %s2177 = ssub.s32 384, 384
      %2178 = vsyncadd [#allocation4], %s2177
      %s2180 = sshll.u32 [#allocation11], 4
      %s2181 = int_to_ptr.vmem [resolvable:$true] %s2180
      %2183 = dma.vmem_to_hbm [thread:$0]  %s2181, 384, %s7, [#allocation4]
    $region53: #{tpu_custom_call.1} parent=1 // pred_fallthru
      _
    // Predicated region
    $region54: #{tpu_custom_call.1} parent=1 // pred_check
      _
    $region55: #{tpu_custom_call.1} parent=1 // pred_check_branch
      %2185 = sbr.rel (0) target = $region57
    $region56: #{tpu_custom_call.1} parent=1 // pred_region
      %2186 = dma.done [#allocation4], 384
    $region57: #{tpu_custom_call.1} parent=1 // pred_fallthru
      _
    %2187 = vsyncpa [#allocation3], 1
    %2188 = vsyncpa [#allocation6], 1
    %2189 = vsyncpa [#allocation9], 1
    %2190 = vsyncpa [#allocation4], 1

</llo_original>
